<compile_context>
chip_gen: v5e
topology: v5e:2x2
jax: 0.10.0
libtpu: 0.0.40
codegen_flags: <defaults>
</compile_context>

<pallas_src>
import jax
import jax.numpy as jnp
from jax import lax
from jax.experimental import pallas as pl
from jax.experimental.pallas import tpu as pltpu

INV_SQRT2 = 0.7071067811865476
NEG_BIG = -1e30  # bias for padded classes; exp() underflows to exactly 0.0 in f32


def _round_up(x, m):
    return (x + m - 1) // m * m


def _discriminator_kernel(ids_ref, freq_ref, labels_ref, table_ref,
                          wp_ref, bp_ref, wd_ref, bd_ref, wo_ref, bo_ref,
                          out_ref, acc_ref):
    """One (batch_block, vocab_block) grid step.

    Grid axis 0 (batch): "parallel"  -- independent row blocks (megacore).
    Grid axis 1 (vocab): "arbitrary" -- streams (TV, Ep) table tiles through
    VMEM and accumulates the pooled embedding in an f32 scratch; the head
    (projection -> dense -> exact GELU -> out_proj -> softmax / NLL) runs on
    the last vocab tile only.
    """
    v = pl.program_id(1)
    nv = pl.num_programs(1)
    tb, seq_len = ids_ref.shape
    tv = table_ref.shape[0]
    hp = bp_ref.shape[-1]
    lp = bo_ref.shape[-1]

    # ---- init pooled accumulator on the first vocab tile of each batch block
    @pl.when(v == 0)
    def _():
        acc_ref[...] = jnp.zeros_like(acc_ref)

    # ---- frequency-normalised pooling weights (f32 elementwise) ----
    # (matches torch: divides by zero -> NaN if a row's frequencies sum to 0)
    ids = ids_ref[...]                                   # (TB, S) int32
    freq = freq_ref[...]                                 # (TB, S) f32
    w = freq / jnp.sum(freq, axis=1, keepdims=True)      # (TB, S)

    # ---- (TB, TV) slice of the pooling matrix, no (B, S, V) materialization:
    # loop over the (small, static) sequence axis; accumulate w[b,s] into the
    # column matching ids[b,s] if it falls inside this vocab tile.
    col = v * tv + lax.broadcasted_iota(jnp.int32, (tb, tv), 1)
    pool = jnp.zeros((tb, tv), jnp.float32)
    for s in range(seq_len):                             # static trip count
        pool = pool + jnp.where(ids[:, s:s + 1] == col, w[:, s:s + 1], 0.0)

    # pooled += pool @ table_tile   (bf16 MXU operands, f32 accumulation)
    acc_ref[...] += jnp.dot(pool.astype(table_ref.dtype), table_ref[...],
                            preferred_element_type=jnp.float32)

    # ---- classification head + softmax + per-row NLL on the last tile ----
    @pl.when(v == nv - 1)
    def _():
        pooled = acc_ref[...]                                          # (TB, Ep) f32

        # self.projection (vocab_embed_dim != hidden_size in this config)
        x = jnp.dot(pooled.astype(wp_ref.dtype), wp_ref[...],
                    preferred_element_type=jnp.float32) + bp_ref[...]  # (TB, Hp)

        # ElectraClassificationHead: dense -> exact GELU -> out_proj
        # (dropout is identity at inference)
        h = jnp.dot(x.astype(wd_ref.dtype), wd_ref[...],
                    preferred_element_type=jnp.float32) + bd_ref[...]
        h = 0.5 * h * (1.0 + lax.erf(h * INV_SQRT2))                   # exact gelu, f32
        logits = jnp.dot(h.astype(wo_ref.dtype), wo_ref[...],
                         preferred_element_type=jnp.float32) + bo_ref[...]  # (TB, Lp)

        # softmax over the padded class axis (padded logits = -1e30 -> exp == 0)
        m = jnp.max(logits, axis=-1, keepdims=True)
        z = logits - m
        ez = jnp.exp(z)
        se = jnp.sum(ez, axis=-1, keepdims=True)
        scores = ez / se                                               # (TB, Lp)
        logp = z - jnp.log(se)

        labels = labels_ref[...]                                       # (TB, 1) int32
        lab_oh = (labels == lax.broadcasted_iota(jnp.int32, logits.shape, 1)
                  ).astype(jnp.float32)
        nll = -jnp.sum(logp * lab_oh, axis=-1, keepdims=True)          # (TB, 1)

        # Lane-dense output slab:
        #   cols [0, Hp)        : projected embeddings ("data" before unsqueeze)
        #   cols [Hp, Hp+L)     : softmax scores (padded classes are exactly 0)
        #   col  Hp+Lp-1        : per-row NLL (stashed in the scores padding)
        col_l = lax.broadcasted_iota(jnp.int32, scores.shape, 1)
        scores_slab = jnp.where(col_l == (lp - 1), nll, scores)
        out_ref[:, :hp] = x
        out_ref[:, hp:] = scores_slab


def electra_discriminator_forward(params, data, labels, frequencies=None,
                                  return_embeddings=False,
                                  block_b=None, block_v=None):
    """Static-embeddings ElectraDiscriminator.forward."""
    B, S = data.shape
    table = params["embeddings"]                   # (V, E)
    wp, bp = params["proj_w"], params["proj_b"]    # (E, H), (1, H)
    wd, bd = params["dense_w"], params["dense_b"]  # (H, H), (1, H)
    wo, bo = params["out_w"], params["out_b"]      # (H, L), (1, L)
    V, E = table.shape
    H = wp.shape[1]
    L = wo.shape[1]

    # ---- padded / tiled sizes (lane-dense: multiples of 128) ----
    Ep = _round_up(E, 128)
    Hp = _round_up(H, 128)
    Lp = _round_up(L + 1, 128)        # +1 reserves a padding column for the NLL
    W = Hp + Lp

    if block_b is None:               # gang rows to fill the MXU when possible
        block_b = 128 if B >= 128 else _round_up(B, 8)
    BP = _round_up(B, block_b)
    if block_v is None:               # vocab tile streamed through VMEM
        block_v = 512 if V > 512 else _round_up(V, 8)
    VP = _round_up(V, block_v)
    nb, nv = BP // block_b, VP // block_v

    if frequencies is None:           # data.mean(dim=1) == uniform weights
        frequencies = jnp.ones((B, S), jnp.float32)

    # ---- pad + cast (bf16 matmul operands; everything else f32) ----
    f32, bf16 = jnp.float32, jnp.bfloat16
    ids_p = jnp.pad(data.astype(jnp.int32), ((0, BP - B), (0, 0)))
    freq_p = jnp.pad(frequencies.astype(f32), ((0, BP - B), (0, 0)),
                     constant_values=1.0)
    lab_p = jnp.pad(labels.reshape(B, 1).astype(jnp.int32), ((0, BP - B), (0, 0)))
    table_p = jnp.pad(table.astype(f32), ((0, VP - V), (0, Ep - E))).astype(bf16)
    wp_p = jnp.pad(wp.astype(f32), ((0, Ep - E), (0, Hp - H))).astype(bf16)
    wd_p = jnp.pad(wd.astype(f32), ((0, Hp - H), (0, Hp - H))).astype(bf16)
    wo_p = jnp.pad(wo.astype(f32), ((0, Hp - H), (0, Lp - L))).astype(bf16)
    bp_p = jnp.pad(bp.astype(f32), ((0, 0), (0, Hp - H)))
    bd_p = jnp.pad(bd.astype(f32), ((0, 0), (0, Hp - H)))
    bo_p = jnp.pad(bo.astype(f32), ((0, 0), (0, Lp - L)), constant_values=NEG_BIG)

    batch_map = lambda b, v: (b, 0)
    const_map = lambda b, v: (0, 0)
    in_specs = [
        pl.BlockSpec((block_b, S), batch_map),             # token ids
        pl.BlockSpec((block_b, S), batch_map),             # frequencies
        pl.BlockSpec((block_b, 1), batch_map),             # labels
        pl.BlockSpec((block_v, Ep), lambda b, v: (v, 0)),  # table tile (streamed)
        pl.BlockSpec((Ep, Hp), const_map),                 # proj_w
        pl.BlockSpec((1, Hp), const_map),                  # proj_b
        pl.BlockSpec((Hp, Hp), const_map),                 # dense_w
        pl.BlockSpec((1, Hp), const_map),                  # dense_b
        pl.BlockSpec((Hp, Lp), const_map),                 # out_w
        pl.BlockSpec((1, Lp), const_map),                  # out_b
    ]
    out_spec = pl.BlockSpec((block_b, W), batch_map)

    # ---- advisory cost estimate + VMEM sized to the actual blocks ----
    flops = int(2 * BP * (VP * Ep + Ep * Hp + Hp * Hp + Hp * Lp) + BP * S * VP)
    transcendentals = int(BP * (Hp + Lp))
    bytes_accessed = int(
        (ids_p.size + freq_p.size + lab_p.size) * 4
        + (table_p.size + wp_p.size + wd_p.size + wo_p.size) * 2
        + (bp_p.size + bd_p.size + bo_p.size) * 4 + BP * W * 4)
    resident = 2 * (block_b * S * 4 * 2 + block_b * 4          # ids, freq, labels
                    + block_v * Ep * 2                         # table tile
                    + (Ep * Hp + Hp * Hp + Hp * Lp) * 2        # weights (bf16)
                    + (2 * Hp + Lp) * 4                        # biases
                    + block_b * W * 4)                         # output slab
    resident += block_b * Ep * 4                               # f32 accumulator
    vmem_limit = int(min(max(resident + (4 << 20), 16 << 20), 128 << 20))

    slab = pl.pallas_call(
        _discriminator_kernel,
        grid=(nb, nv),
        in_specs=in_specs,
        out_specs=out_spec,
        out_shape=jax.ShapeDtypeStruct((BP, W), jnp.float32),
        scratch_shapes=[pltpu.VMEM((block_b, Ep), jnp.float32)],
        compiler_params=pltpu.CompilerParams(
            dimension_semantics=("parallel", "arbitrary"),
            vmem_limit_bytes=vmem_limit),
        cost_estimate=pl.CostEstimate(flops=flops,
                                      transcendentals=transcendentals,
                                      bytes_accessed=bytes_accessed),
    )(ids_p, freq_p, lab_p, table_p, wp_p, bp_p, wd_p, bd_p, wo_p, bo_p)

    emb = slab[:B, :H]                     # projected embeddings ("data")
    scores = slab[:B, Hp:Hp + L]           # softmax(logits, dim=1)
    nll = slab[:B, Hp + Lp - 1]            # per-row cross entropy
    loss = jnp.mean(nll)                   # CrossEntropyLoss (mean reduction)
    if return_embeddings:
        return loss, scores, emb[:, None, :]   # data.unsqueeze(1): (B, 1, H)
    return loss, scores


def init_params(key, vocab_size, embed_dim, hidden_size, num_labels):
    """Deterministic synthetic parameters (shapes follow the module's __init__)."""
    ks = jax.random.split(key, 7)
    embeddings = 0.02 * jax.random.normal(ks[0], (vocab_size, embed_dim), jnp.float32)
    # nn.Linear weights are (out, in) in torch; keep (in, out) here so the
    # kernel computes x @ W + b == torch's x @ W.T + b.
    proj_w = 0.05 * jax.random.normal(ks[1], (embed_dim, hidden_size), jnp.float32)
    proj_b = 0.01 * jax.random.normal(ks[2], (1, hidden_size), jnp.float32)
    dense_w = 0.05 * jax.random.normal(ks[3], (hidden_size, hidden_size), jnp.float32)
    dense_b = 0.01 * jax.random.normal(ks[4], (1, hidden_size), jnp.float32)
    out_w = 0.05 * jax.random.normal(ks[5], (hidden_size, num_labels), jnp.float32)
    out_b = 0.01 * jax.random.normal(ks[6], (1, num_labels), jnp.float32)
    return {"embeddings": embeddings,
            "proj_w": proj_w, "proj_b": proj_b,
            "dense_w": dense_w, "dense_b": dense_b,
            "out_w": out_w, "out_b": out_b}


def _ref_forward(params, data, labels, frequencies):
    """Pure-JAX f32 reference of the module forward (for tolerance check)."""
    w = frequencies / jnp.sum(frequencies, axis=1, keepdims=True)
    emb_tok = params["embeddings"][data]                       # (B, S, E) gather
    pooled = jnp.sum(emb_tok * w[..., None], axis=1)           # (B, E)
    x = pooled @ params["proj_w"] + params["proj_b"]
    h = x @ params["dense_w"] + params["dense_b"]
    h = 0.5 * h * (1.0 + lax.erf(h * INV_SQRT2))
    logits = h @ params["out_w"] + params["out_b"]
    scores = jax.nn.softmax(logits, axis=1)
    logp = jax.nn.log_softmax(logits, axis=1)
    nll = -jnp.take_along_axis(logp, labels[:, None], axis=1)[:, 0]
    return jnp.mean(nll), scores, x


if __name__ == "__main__":
    # Small config: vocab=384, vocab_embed_dim=48, hidden=96, num_labels=3,
    # batch=16, seq=10.  block_b=8 / block_v=128 exercise the 2-D grid
    # (2 parallel batch blocks x 3 streamed vocab tiles).
    B, S, V, E, H, L = 16, 10, 384, 48, 96, 3

    key = jax.random.PRNGKey(0)
    kparam, kdata, kfreq, klab = jax.random.split(key, 4)
    params = init_params(kparam, V, E, H, L)

    data = jax.random.randint(kdata, (B, S), 0, V, dtype=jnp.int32)     # token ids
    freqs = jax.random.uniform(kfreq, (B, S), jnp.float32, 0.1, 1.0)    # frequencies
    labels = jax.random.randint(klab, (B,), 0, L, dtype=jnp.int32)

    loss, scores, emb = electra_discriminator_forward(
        params, data, labels, frequencies=freqs, return_embeddings=True,
        block_b=8, block_v=128)
    jax.block_until_ready((loss, scores, emb))

    assert scores.shape == (B, L)
    assert emb.shape == (B, 1, H)
    assert bool(jnp.isfinite(loss))
    assert bool(jnp.all(jnp.isfinite(scores)))
    # softmax rows must sum to 1
    assert bool(jnp.all(jnp.abs(jnp.sum(scores, axis=1) - 1.0) < 1e-5))

    # loose parity vs. f32 reference (kernel uses bf16 matmul operands)
    ref_loss, ref_scores, ref_emb = _ref_forward(
        params, data.astype(jnp.int32), labels, freqs)
    assert float(jnp.max(jnp.abs(scores - ref_scores))) < 5e-2
    assert float(jnp.max(jnp.abs(emb[:, 0, :] - ref_emb))) < 5e-3
    assert abs(float(loss) - float(ref_loss)) < 5e-2

    print("KERNEL_OK")
</pallas_src>

<mosaic_0001>
module attributes {stable_mosaic.version = 11 : i64} {
  func.func @_discriminator_kernel(%arg0: i32, %arg1: i32, %arg2: memref<8x10xi32, #tpu.memory_space<vmem>>, %arg3: memref<8x10xf32, #tpu.memory_space<vmem>>, %arg4: memref<8x1xi32, #tpu.memory_space<vmem>>, %arg5: memref<128x128xbf16, #tpu.memory_space<vmem>>, %arg6: memref<128x128xbf16, #tpu.memory_space<vmem>>, %arg7: memref<1x128xf32, #tpu.memory_space<vmem>>, %arg8: memref<128x128xbf16, #tpu.memory_space<vmem>>, %arg9: memref<1x128xf32, #tpu.memory_space<vmem>>, %arg10: memref<128x128xbf16, #tpu.memory_space<vmem>>, %arg11: memref<1x128xf32, #tpu.memory_space<vmem>>, %arg12: memref<8x256xf32, #tpu.memory_space<vmem>>, %arg13: memref<8x128xf32, #tpu.memory_space<vmem>>) attributes {dimension_semantics = [#tpu.dimension_semantics<parallel>, #tpu.dimension_semantics<arbitrary>], iteration_bounds = array<i64: 2, 3>, scalar_prefetch = 0 : i64, scratch_operands = 1 : i64, tpu.core_type = #tpu.core_type<tc>, window_params = [{transform_indices = @transform_0, window_bounds = array<i64: 8, 10>}, {transform_indices = @transform_1, window_bounds = array<i64: 8, 10>}, {transform_indices = @transform_2, window_bounds = array<i64: 8, 1>}, {transform_indices = @transform_3, window_bounds = array<i64: 128, 128>}, {pipeline_mode = #tpu.pipeline_mode<synchronous>, transform_indices = @transform_4, window_bounds = array<i64: 128, 128>}, {pipeline_mode = #tpu.pipeline_mode<synchronous>, transform_indices = @transform_5, window_bounds = array<i64: 1, 128>}, {pipeline_mode = #tpu.pipeline_mode<synchronous>, transform_indices = @transform_6, window_bounds = array<i64: 128, 128>}, {pipeline_mode = #tpu.pipeline_mode<synchronous>, transform_indices = @transform_7, window_bounds = array<i64: 1, 128>}, {pipeline_mode = #tpu.pipeline_mode<synchronous>, transform_indices = @transform_8, window_bounds = array<i64: 128, 128>}, {pipeline_mode = #tpu.pipeline_mode<synchronous>, transform_indices = @transform_9, window_bounds = array<i64: 1, 128>}, {transform_indices = @transform_10, window_bounds = array<i64: 8, 256>}]} {
    %c0_i32 = arith.constant 0 : i32
    %0 = arith.cmpi eq, %arg1, %c0_i32 : i32
    %1 = arith.extui %0 : i1 to i32
    %c0_i32_0 = arith.constant 0 : i32
    %2 = arith.cmpi ne, %1, %c0_i32_0 : i32
    scf.if %2 {
      %cst_23 = arith.constant 0.000000e+00 : f32
      %113 = vector.broadcast %cst_23 : f32 to vector<8x128xf32>
      %c0_24 = arith.constant 0 : index
      %c0_25 = arith.constant 0 : index
      %114 = vector.load %arg13[%c0_24, %c0_25] : memref<8x128xf32, #tpu.memory_space<vmem>>, vector<8x128xf32>
      tpu.vector_store %arg13[%c0_24, %c0_25], %113 {strides = array<i32>} : memref<8x128xf32, #tpu.memory_space<vmem>>, vector<8x128xf32>,
    } else {
    }
    %c0 = arith.constant 0 : index
    %c0_1 = arith.constant 0 : index
    %3 = vector.load %arg2[%c0, %c0_1] : memref<8x10xi32, #tpu.memory_space<vmem>>, vector<8x10xi32>
    %c0_2 = arith.constant 0 : index
    %c0_3 = arith.constant 0 : index
    %4 = vector.load %arg3[%c0_2, %c0_3] : memref<8x10xf32, #tpu.memory_space<vmem>>, vector<8x10xf32>
    %cst = arith.constant dense<0.000000e+00> : vector<8xf32>
    %5 = vector.multi_reduction <add>, %4, %cst [1] : vector<8x10xf32> to vector<8xf32>
    %6 = vector.shape_cast %5 : vector<8xf32> to vector<8x1xf32>
    %7 = vector.broadcast %6 : vector<8x1xf32> to vector<8x10xf32>
    %8 = arith.divf %4, %7 : vector<8x10xf32>
    %c128_i32 = arith.constant 128 : i32
    %9 = arith.muli %arg1, %c128_i32 : i32
    %10 = tpu.iota {dimensions = array<i32: 1>} : vector<8x128xi32>
    %11 = vector.broadcast %9 : i32 to vector<8x128xi32>
    %12 = arith.addi %11, %10 : vector<8x128xi32>
    %cst_4 = arith.constant 0.000000e+00 : f32
    %13 = vector.broadcast %cst_4 : f32 to vector<8x128xf32>
    %14 = vector.extract_strided_slice %3 {offsets = [0, 0], sizes = [8, 1], strides = [1, 1]} : vector<8x10xi32> to vector<8x1xi32>
    %15 = vector.broadcast %14 : vector<8x1xi32> to vector<8x128xi32>
    %16 = arith.cmpi eq, %15, %12 : vector<8x128xi32>
    %17 = vector.extract_strided_slice %8 {offsets = [0, 0], sizes = [8, 1], strides = [1, 1]} : vector<8x10xf32> to vector<8x1xf32>
    %cst_5 = arith.constant 0.000000e+00 : f32
    %18 = vector.shape_cast %17 : vector<8x1xf32> to vector<8x1xf32>
    %19 = vector.broadcast %18 : vector<8x1xf32> to vector<8x128xf32>
    %20 = vector.broadcast %cst_5 : f32 to vector<8x128xf32>
    %21 = arith.select %16, %19, %20 : vector<8x128xi1>, vector<8x128xf32>
    %22 = arith.addf %13, %21 : vector<8x128xf32>
    %23 = vector.extract_strided_slice %3 {offsets = [0, 1], sizes = [8, 1], strides = [1, 1]} : vector<8x10xi32> to vector<8x1xi32>
    %24 = vector.broadcast %23 : vector<8x1xi32> to vector<8x128xi32>
    %25 = arith.cmpi eq, %24, %12 : vector<8x128xi32>
    %26 = vector.extract_strided_slice %8 {offsets = [0, 1], sizes = [8, 1], strides = [1, 1]} : vector<8x10xf32> to vector<8x1xf32>
    %cst_6 = arith.constant 0.000000e+00 : f32
    %27 = vector.shape_cast %26 : vector<8x1xf32> to vector<8x1xf32>
    %28 = vector.broadcast %27 : vector<8x1xf32> to vector<8x128xf32>
    %29 = vector.broadcast %cst_6 : f32 to vector<8x128xf32>
    %30 = arith.select %25, %28, %29 : vector<8x128xi1>, vector<8x128xf32>
    %31 = arith.addf %22, %30 : vector<8x128xf32>
    %32 = vector.extract_strided_slice %3 {offsets = [0, 2], sizes = [8, 1], strides = [1, 1]} : vector<8x10xi32> to vector<8x1xi32>
    %33 = vector.broadcast %32 : vector<8x1xi32> to vector<8x128xi32>
    %34 = arith.cmpi eq, %33, %12 : vector<8x128xi32>
    %35 = vector.extract_strided_slice %8 {offsets = [0, 2], sizes = [8, 1], strides = [1, 1]} : vector<8x10xf32> to vector<8x1xf32>
    %cst_7 = arith.constant 0.000000e+00 : f32
    %36 = vector.shape_cast %35 : vector<8x1xf32> to vector<8x1xf32>
    %37 = vector.broadcast %36 : vector<8x1xf32> to vector<8x128xf32>
    %38 = vector.broadcast %cst_7 : f32 to vector<8x128xf32>
    %39 = arith.select %34, %37, %38 : vector<8x128xi1>, vector<8x128xf32>
    %40 = arith.addf %31, %39 : vector<8x128xf32>
    %41 = vector.extract_strided_slice %3 {offsets = [0, 3], sizes = [8, 1], strides = [1, 1]} : vector<8x10xi32> to vector<8x1xi32>
    %42 = vector.broadcast %41 : vector<8x1xi32> to vector<8x128xi32>
    %43 = arith.cmpi eq, %42, %12 : vector<8x128xi32>
    %44 = vector.extract_strided_slice %8 {offsets = [0, 3], sizes = [8, 1], strides = [1, 1]} : vector<8x10xf32> to vector<8x1xf32>
    %cst_8 = arith.constant 0.000000e+00 : f32
    %45 = vector.shape_cast %44 : vector<8x1xf32> to vector<8x1xf32>
    %46 = vector.broadcast %45 : vector<8x1xf32> to vector<8x128xf32>
    %47 = vector.broadcast %cst_8 : f32 to vector<8x128xf32>
    %48 = arith.select %43, %46, %47 : vector<8x128xi1>, vector<8x128xf32>
    %49 = arith.addf %40, %48 : vector<8x128xf32>
    %50 = vector.extract_strided_slice %3 {offsets = [0, 4], sizes = [8, 1], strides = [1, 1]} : vector<8x10xi32> to vector<8x1xi32>
    %51 = vector.broadcast %50 : vector<8x1xi32> to vector<8x128xi32>
    %52 = arith.cmpi eq, %51, %12 : vector<8x128xi32>
    %53 = vector.extract_strided_slice %8 {offsets = [0, 4], sizes = [8, 1], strides = [1, 1]} : vector<8x10xf32> to vector<8x1xf32>
    %cst_9 = arith.constant 0.000000e+00 : f32
    %54 = vector.shape_cast %53 : vector<8x1xf32> to vector<8x1xf32>
    %55 = vector.broadcast %54 : vector<8x1xf32> to vector<8x128xf32>
    %56 = vector.broadcast %cst_9 : f32 to vector<8x128xf32>
    %57 = arith.select %52, %55, %56 : vector<8x128xi1>, vector<8x128xf32>
    %58 = arith.addf %49, %57 : vector<8x128xf32>
    %59 = vector.extract_strided_slice %3 {offsets = [0, 5], sizes = [8, 1], strides = [1, 1]} : vector<8x10xi32> to vector<8x1xi32>
    %60 = vector.broadcast %59 : vector<8x1xi32> to vector<8x128xi32>
    %61 = arith.cmpi eq, %60, %12 : vector<8x128xi32>
    %62 = vector.extract_strided_slice %8 {offsets = [0, 5], sizes = [8, 1], strides = [1, 1]} : vector<8x10xf32> to vector<8x1xf32>
    %cst_10 = arith.constant 0.000000e+00 : f32
    %63 = vector.shape_cast %62 : vector<8x1xf32> to vector<8x1xf32>
    %64 = vector.broadcast %63 : vector<8x1xf32> to vector<8x128xf32>
    %65 = vector.broadcast %cst_10 : f32 to vector<8x128xf32>
    %66 = arith.select %61, %64, %65 : vector<8x128xi1>, vector<8x128xf32>
    %67 = arith.addf %58, %66 : vector<8x128xf32>
    %68 = vector.extract_strided_slice %3 {offsets = [0, 6], sizes = [8, 1], strides = [1, 1]} : vector<8x10xi32> to vector<8x1xi32>
    %69 = vector.broadcast %68 : vector<8x1xi32> to vector<8x128xi32>
    %70 = arith.cmpi eq, %69, %12 : vector<8x128xi32>
    %71 = vector.extract_strided_slice %8 {offsets = [0, 6], sizes = [8, 1], strides = [1, 1]} : vector<8x10xf32> to vector<8x1xf32>
    %cst_11 = arith.constant 0.000000e+00 : f32
    %72 = vector.shape_cast %71 : vector<8x1xf32> to vector<8x1xf32>
    %73 = vector.broadcast %72 : vector<8x1xf32> to vector<8x128xf32>
    %74 = vector.broadcast %cst_11 : f32 to vector<8x128xf32>
    %75 = arith.select %70, %73, %74 : vector<8x128xi1>, vector<8x128xf32>
    %76 = arith.addf %67, %75 : vector<8x128xf32>
    %77 = vector.extract_strided_slice %3 {offsets = [0, 7], sizes = [8, 1], strides = [1, 1]} : vector<8x10xi32> to vector<8x1xi32>
    %78 = vector.broadcast %77 : vector<8x1xi32> to vector<8x128xi32>
    %79 = arith.cmpi eq, %78, %12 : vector<8x128xi32>
    %80 = vector.extract_strided_slice %8 {offsets = [0, 7], sizes = [8, 1], strides = [1, 1]} : vector<8x10xf32> to vector<8x1xf32>
    %cst_12 = arith.constant 0.000000e+00 : f32
    %81 = vector.shape_cast %80 : vector<8x1xf32> to vector<8x1xf32>
    %82 = vector.broadcast %81 : vector<8x1xf32> to vector<8x128xf32>
    %83 = vector.broadcast %cst_12 : f32 to vector<8x128xf32>
    %84 = arith.select %79, %82, %83 : vector<8x128xi1>, vector<8x128xf32>
    %85 = arith.addf %76, %84 : vector<8x128xf32>
    %86 = vector.extract_strided_slice %3 {offsets = [0, 8], sizes = [8, 1], strides = [1, 1]} : vector<8x10xi32> to vector<8x1xi32>
    %87 = vector.broadcast %86 : vector<8x1xi32> to vector<8x128xi32>
    %88 = arith.cmpi eq, %87, %12 : vector<8x128xi32>
    %89 = vector.extract_strided_slice %8 {offsets = [0, 8], sizes = [8, 1], strides = [1, 1]} : vector<8x10xf32> to vector<8x1xf32>
    %cst_13 = arith.constant 0.000000e+00 : f32
    %90 = vector.shape_cast %89 : vector<8x1xf32> to vector<8x1xf32>
    %91 = vector.broadcast %90 : vector<8x1xf32> to vector<8x128xf32>
    %92 = vector.broadcast %cst_13 : f32 to vector<8x128xf32>
    %93 = arith.select %88, %91, %92 : vector<8x128xi1>, vector<8x128xf32>
    %94 = arith.addf %85, %93 : vector<8x128xf32>
    %95 = vector.extract_strided_slice %3 {offsets = [0, 9], sizes = [8, 1], strides = [1, 1]} : vector<8x10xi32> to vector<8x1xi32>
    %96 = vector.broadcast %95 : vector<8x1xi32> to vector<8x128xi32>
    %97 = arith.cmpi eq, %96, %12 : vector<8x128xi32>
    %98 = vector.extract_strided_slice %8 {offsets = [0, 9], sizes = [8, 1], strides = [1, 1]} : vector<8x10xf32> to vector<8x1xf32>
    %cst_14 = arith.constant 0.000000e+00 : f32
    %99 = vector.shape_cast %98 : vector<8x1xf32> to vector<8x1xf32>
    %100 = vector.broadcast %99 : vector<8x1xf32> to vector<8x128xf32>
    %101 = vector.broadcast %cst_14 : f32 to vector<8x128xf32>
    %102 = arith.select %97, %100, %101 : vector<8x128xi1>, vector<8x128xf32>
    %103 = arith.addf %94, %102 : vector<8x128xf32>
    %c0_15 = arith.constant 0 : index
    %c0_16 = arith.constant 0 : index
    %104 = vector.load %arg13[%c0_15, %c0_16] : memref<8x128xf32, #tpu.memory_space<vmem>>, vector<8x128xf32>
    %105 = arith.truncf %103 : vector<8x128xf32> to vector<8x128xbf16>
    %c0_17 = arith.constant 0 : index
    %c0_18 = arith.constant 0 : index
    %106 = vector.load %arg5[%c0_17, %c0_18] : memref<128x128xbf16, #tpu.memory_space<vmem>>, vector<128x128xbf16>
    %cst_19 = arith.constant dense<0.000000e+00> : vector<8x128xf32>
    %107 = tpu.matmul %105, %106, %cst_19 {dimension_numbers = #tpu.dot_dimension_numbers<[1], [0], [0], [1], [0, 0, 1, 1], [], []>} : vector<8x128xbf16>, vector<128x128xbf16>, vector<8x128xf32> -> vector<8x128xf32>
    %108 = arith.addf %104, %107 : vector<8x128xf32>
    %c0_20 = arith.constant 0 : index
    %c0_21 = arith.constant 0 : index
    %109 = vector.load %arg13[%c0_20, %c0_21] : memref<8x128xf32, #tpu.memory_space<vmem>>, vector<8x128xf32>
    tpu.vector_store %arg13[%c0_20, %c0_21], %108 {strides = array<i32>} : memref<8x128xf32, #tpu.memory_space<vmem>>, vector<8x128xf32>,
    %c2_i32 = arith.constant 2 : i32
    %110 = arith.cmpi eq, %arg1, %c2_i32 : i32
    %111 = arith.extui %110 : i1 to i32
    %c0_i32_22 = arith.constant 0 : i32
    %112 = arith.cmpi ne, %111, %c0_i32_22 : i32
    scf.if %112 {
      %c0_23 = arith.constant 0 : index
      %c0_24 = arith.constant 0 : index
      %113 = vector.load %arg13[%c0_23, %c0_24] : memref<8x128xf32, #tpu.memory_space<vmem>>, vector<8x128xf32>
      %114 = arith.truncf %113 : vector<8x128xf32> to vector<8x128xbf16>
      %c0_25 = arith.constant 0 : index
      %c0_26 = arith.constant 0 : index
      %115 = vector.load %arg6[%c0_25, %c0_26] : memref<128x128xbf16, #tpu.memory_space<vmem>>, vector<128x128xbf16>
      %cst_27 = arith.constant dense<0.000000e+00> : vector<8x128xf32>
      %116 = tpu.matmul %114, %115, %cst_27 {dimension_numbers = #tpu.dot_dimension_numbers<[1], [0], [0], [1], [0, 0, 1, 1], [], []>} : vector<8x128xbf16>, vector<128x128xbf16>, vector<8x128xf32> -> vector<8x128xf32>
      %c0_28 = arith.constant 0 : index
      %c0_29 = arith.constant 0 : index
      %117 = vector.load %arg7[%c0_28, %c0_29] : memref<1x128xf32, #tpu.memory_space<vmem>>, vector<1x128xf32>
      %118 = vector.broadcast %117 : vector<1x128xf32> to vector<8x128xf32>
      %119 = arith.addf %116, %118 : vector<8x128xf32>
      %120 = arith.truncf %119 : vector<8x128xf32> to vector<8x128xbf16>
      %c0_30 = arith.constant 0 : index
      %c0_31 = arith.constant 0 : index
      %121 = vector.load %arg8[%c0_30, %c0_31] : memref<128x128xbf16, #tpu.memory_space<vmem>>, vector<128x128xbf16>
      %cst_32 = arith.constant dense<0.000000e+00> : vector<8x128xf32>
      %122 = tpu.matmul %120, %121, %cst_32 {dimension_numbers = #tpu.dot_dimension_numbers<[1], [0], [0], [1], [0, 0, 1, 1], [], []>} : vector<8x128xbf16>, vector<128x128xbf16>, vector<8x128xf32> -> vector<8x128xf32>
      %c0_33 = arith.constant 0 : index
      %c0_34 = arith.constant 0 : index
      %123 = vector.load %arg9[%c0_33, %c0_34] : memref<1x128xf32, #tpu.memory_space<vmem>>, vector<1x128xf32>
      %124 = vector.broadcast %123 : vector<1x128xf32> to vector<8x128xf32>
      %125 = arith.addf %122, %124 : vector<8x128xf32>
      %cst_35 = arith.constant 5.000000e-01 : f32
      %126 = vector.broadcast %cst_35 : f32 to vector<8x128xf32>
      %127 = arith.mulf %126, %125 : vector<8x128xf32>
      %cst_36 = arith.constant 0.707106769 : f32
      %128 = vector.broadcast %cst_36 : f32 to vector<8x128xf32>
      %129 = arith.mulf %125, %128 : vector<8x128xf32>
      %130 = math.erf %129 : vector<8x128xf32>
      %cst_37 = arith.constant 1.000000e+00 : f32
      %131 = vector.broadcast %cst_37 : f32 to vector<8x128xf32>
      %132 = arith.addf %131, %130 : vector<8x128xf32>
      %133 = arith.mulf %127, %132 : vector<8x128xf32>
      %134 = arith.truncf %133 : vector<8x128xf32> to vector<8x128xbf16>
      %c0_38 = arith.constant 0 : index
      %c0_39 = arith.constant 0 : index
      %135 = vector.load %arg10[%c0_38, %c0_39] : memref<128x128xbf16, #tpu.memory_space<vmem>>, vector<128x128xbf16>
      %cst_40 = arith.constant dense<0.000000e+00> : vector<8x128xf32>
      %136 = tpu.matmul %134, %135, %cst_40 {dimension_numbers = #tpu.dot_dimension_numbers<[1], [0], [0], [1], [0, 0, 1, 1], [], []>} : vector<8x128xbf16>, vector<128x128xbf16>, vector<8x128xf32> -> vector<8x128xf32>
      %c0_41 = arith.constant 0 : index
      %c0_42 = arith.constant 0 : index
      %137 = vector.load %arg11[%c0_41, %c0_42] : memref<1x128xf32, #tpu.memory_space<vmem>>, vector<1x128xf32>
      %138 = vector.broadcast %137 : vector<1x128xf32> to vector<8x128xf32>
      %139 = arith.addf %136, %138 : vector<8x128xf32>
      %cst_43 = arith.constant dense<0xFF800000> : vector<8xf32>
      %140 = vector.multi_reduction <maximumf>, %139, %cst_43 [1] : vector<8x128xf32> to vector<8xf32>
      %141 = vector.shape_cast %140 : vector<8xf32> to vector<8x1xf32>
      %142 = vector.broadcast %141 : vector<8x1xf32> to vector<8x128xf32>
      %143 = arith.subf %139, %142 : vector<8x128xf32>
      %144 = math.exp %143 : vector<8x128xf32>
      %cst_44 = arith.constant dense<0.000000e+00> : vector<8xf32>
      %145 = vector.multi_reduction <add>, %144, %cst_44 [1] : vector<8x128xf32> to vector<8xf32>
      %146 = vector.shape_cast %145 : vector<8xf32> to vector<8x1xf32>
      %147 = vector.broadcast %146 : vector<8x1xf32> to vector<8x128xf32>
      %148 = arith.divf %144, %147 : vector<8x128xf32>
      %149 = math.log %146 : vector<8x1xf32>
      %150 = vector.broadcast %149 : vector<8x1xf32> to vector<8x128xf32>
      %151 = arith.subf %143, %150 : vector<8x128xf32>
      %c0_45 = arith.constant 0 : index
      %c0_46 = arith.constant 0 : index
      %152 = vector.load %arg4[%c0_45, %c0_46] : memref<8x1xi32, #tpu.memory_space<vmem>>, vector<8x1xi32>
      %153 = tpu.iota {dimensions = array<i32: 1>} : vector<8x128xi32>
      %154 = vector.broadcast %152 : vector<8x1xi32> to vector<8x128xi32>
      %155 = arith.cmpi eq, %154, %153 : vector<8x128xi32>
      %156 = arith.extui %155 : vector<8x128xi1> to vector<8x128xi32>
      %157 = arith.sitofp %156 : vector<8x128xi32> to vector<8x128xf32>
      %158 = arith.mulf %151, %157 : vector<8x128xf32>
      %cst_47 = arith.constant dense<0.000000e+00> : vector<8xf32>
      %159 = vector.multi_reduction <add>, %158, %cst_47 [1] : vector<8x128xf32> to vector<8xf32>
      %160 = vector.shape_cast %159 : vector<8xf32> to vector<8x1xf32>
      %cst_48 = arith.constant 0.000000e+00 : f32
      %161 = vector.broadcast %cst_48 : f32 to vector<8x1xf32>
      %162 = arith.subf %161, %160 : vector<8x1xf32>
      %163 = tpu.iota {dimensions = array<i32: 1>} : vector<8x128xi32>
      %c127_i32 = arith.constant 127 : i32
      %164 = vector.broadcast %c127_i32 : i32 to vector<8x128xi32>
      %165 = arith.cmpi eq, %163, %164 : vector<8x128xi32>
      %166 = vector.shape_cast %162 : vector<8x1xf32> to vector<8x1xf32>
      %167 = vector.broadcast %166 : vector<8x1xf32> to vector<8x128xf32>
      %168 = arith.select %165, %167, %148 : vector<8x128xi1>, vector<8x128xf32>
      %c0_49 = arith.constant 0 : index
      %c0_50 = arith.constant 0 : index
      %169 = vector.load %arg12[%c0_49, %c0_50] : memref<8x256xf32, #tpu.memory_space<vmem>>, vector<8x128xf32>
      tpu.vector_store %arg12[%c0_49, %c0_50], %119 {strides = array<i32>} : memref<8x256xf32, #tpu.memory_space<vmem>>, vector<8x128xf32>,
      %c0_51 = arith.constant 0 : index
      %c128 = arith.constant 128 : index
      %170 = vector.load %arg12[%c0_51, %c128] : memref<8x256xf32, #tpu.memory_space<vmem>>, vector<8x128xf32>
      tpu.vector_store %arg12[%c0_51, %c128], %168 {strides = array<i32>} : memref<8x256xf32, #tpu.memory_space<vmem>>, vector<8x128xf32>,
    } else {
    }
    return
  }
  func.func @transform_0(%arg0: i32, %arg1: i32) -> (i32, i32) {
    %c0_i32 = arith.constant 0 : i32
    %c0_i32_0 = arith.constant 0 : i32
    return %arg0, %c0_i32 : i32, i32
  }
  func.func @transform_1(%arg0: i32, %arg1: i32) -> (i32, i32) {
    %c0_i32 = arith.constant 0 : i32
    %c0_i32_0 = arith.constant 0 : i32
    return %arg0, %c0_i32 : i32, i32
  }
  func.func @transform_2(%arg0: i32, %arg1: i32) -> (i32, i32) {
    %c0_i32 = arith.constant 0 : i32
    %c0_i32_0 = arith.constant 0 : i32
    return %arg0, %c0_i32 : i32, i32
  }
  func.func @transform_3(%arg0: i32, %arg1: i32) -> (i32, i32) {
    %c0_i32 = arith.constant 0 : i32
    %c0_i32_0 = arith.constant 0 : i32
    return %arg1, %c0_i32 : i32, i32
  }
  func.func @transform_4(%arg0: i32, %arg1: i32) -> (i32, i32) {
    %c0_i32 = arith.constant 0 : i32
    %c0_i32_0 = arith.constant 0 : i32
    %c0_i32_1 = arith.constant 0 : i32
    return %c0_i32, %c0_i32_0 : i32, i32
  }
  func.func @transform_5(%arg0: i32, %arg1: i32) -> (i32, i32) {
    %c0_i32 = arith.constant 0 : i32
    %c0_i32_0 = arith.constant 0 : i32
    %c0_i32_1 = arith.constant 0 : i32
    return %c0_i32, %c0_i32_0 : i32, i32
  }
  func.func @transform_6(%arg0: i32, %arg1: i32) -> (i32, i32) {
    %c0_i32 = arith.constant 0 : i32
    %c0_i32_0 = arith.constant 0 : i32
    %c0_i32_1 = arith.constant 0 : i32
    return %c0_i32, %c0_i32_0 : i32, i32
  }
  func.func @transform_7(%arg0: i32, %arg1: i32) -> (i32, i32) {
    %c0_i32 = arith.constant 0 : i32
    %c0_i32_0 = arith.constant 0 : i32
    %c0_i32_1 = arith.constant 0 : i32
    return %c0_i32, %c0_i32_0 : i32, i32
  }
  func.func @transform_8(%arg0: i32, %arg1: i32) -> (i32, i32) {
    %c0_i32 = arith.constant 0 : i32
    %c0_i32_0 = arith.constant 0 : i32
    %c0_i32_1 = arith.constant 0 : i32
    return %c0_i32, %c0_i32_0 : i32, i32
  }
  func.func @transform_9(%arg0: i32, %arg1: i32) -> (i32, i32) {
    %c0_i32 = arith.constant 0 : i32
    %c0_i32_0 = arith.constant 0 : i32
    %c0_i32_1 = arith.constant 0 : i32
    return %c0_i32, %c0_i32_0 : i32, i32
  }
  func.func @transform_10(%arg0: i32, %arg1: i32) -> (i32, i32) {
    %c0_i32 = arith.constant 0 : i32
    %c0_i32_0 = arith.constant 0 : i32
    return %arg0, %c0_i32 : i32, i32
  }
}

</mosaic_0001>

<llo_original>
// kernel: tpu_custom_call.1
$region0: #{tpu_custom_call.1}
  #allocation0 [shape = 'u32[]', space=smem, size = 0x4, offset = 0x4, fixed_abs, tag = 'smem constant byte address 0x4 - core index']
  #allocation1 [shape = 'u32[72,128]{1,0:T(1,128)}', space=vmem, size = 0x9000, scoped, tag = 'internal scratch']
  #allocation2 [shape = 'f32[8,128]{1,0:T(8,128)}', space=vmem, size = 0x1000, scoped, tag = 'scratch operand']
  %s0 = inlined_call_operand.vmem [shape: s32[16,10], index: 0, kind: input, shape index: {}]
  %s1 = inlined_call_operand.hbm [shape: f32[16,10], index: 1, kind: input, shape index: {}]
  %s2 = inlined_call_operand.vmem [shape: s32[16,1], index: 2, kind: input, shape index: {}]
  %s3 = inlined_call_operand.hbm [shape: bf16[384,128], index: 3, kind: input, shape index: {}]
  %s4 = inlined_call_operand.hbm [shape: bf16[128,128], index: 4, kind: input, shape index: {}]
  %s5 = inlined_call_operand.vmem [shape: f32[1,128], index: 5, kind: input, shape index: {}]
  %s6 = inlined_call_operand.hbm [shape: bf16[128,128], index: 6, kind: input, shape index: {}]
  %s7 = inlined_call_operand.vmem [shape: f32[1,128], index: 7, kind: input, shape index: {}]
  %s8 = inlined_call_operand.hbm [shape: bf16[128,128], index: 8, kind: input, shape index: {}]
  %s9 = inlined_call_operand.vmem [shape: f32[1,128], index: 9, kind: input, shape index: {}]
  %s10 = inlined_call_operand.hbm [shape: f32[16,256], index: 10, kind: output, shape index: {}]
  %s11 = sld [smem:[#allocation0]]
  $region101: #{tpu_custom_call.1} parent=0
    _
  %s13 = ssub.s32 1, %s11
  %s14 = scalar_select 0, %s13, %s11
  $region1: #{tpu_custom_call.1} parent=0
    #allocation3 [shape = 'u8[8192]{0}', space=vmem, size = 0x2000, scoped, tag = 'input window, operand 1']
    #allocation4 [shape = 's32[2]{0}', space=sflag, size = 0x8, scoped, tag = 'scoped memory for tpu_custom_call.1']
    #allocation5 [shape = 's32[2]{0}', space=sflag, size = 0x8, scoped, tag = 'scoped memory for tpu_custom_call.1']
    #allocation6 [shape = 'u8[65536]{0}', space=vmem, size = 0x10000, scoped, tag = 'input window, operand 3']
    #allocation7 [shape = 's32[2]{0}', space=sflag, size = 0x8, scoped, tag = 'scoped memory for tpu_custom_call.1']
    #allocation8 [shape = 'u8[32768]{0}', space=vmem, size = 0x8000, scoped, tag = 'input window, operand 4, single buffered']
    #allocation9 [shape = 'u8[32768]{0}', space=vmem, size = 0x8000, scoped, tag = 'input window, operand 6, single buffered']
    #allocation10 [shape = 's32[1]{0}', space=sflag, size = 0x4, scoped, tag = 'scoped memory for tpu_custom_call.1']
    #allocation11 [shape = 'u8[32768]{0}', space=vmem, size = 0x8000, scoped, tag = 'input window, operand 8, single buffered']
    #allocation12 [shape = 'u8[16384]{0}', space=vmem, size = 0x4000, scoped, tag = 'output window, operand 0']
    %15 = vsyncpa [#allocation4], 0
    %s16 = scalar_lea.sflag [#allocation4], 1
    %17 = vsyncpa %s16, 0
    %18 = vsyncpa [#allocation7], 0
    %s19 = scalar_lea.sflag [#allocation7], 1
    %20 = vsyncpa %s19, 0
    %21 = vsyncpa [#allocation10], 0
    %22 = vsyncpa [#allocation5], 0
    %s23 = scalar_lea.sflag [#allocation5], 1
    %24 = vsyncpa %s23, 0
    loop: start=0, step=1, limit=8
    $region2: #{tpu_custom_call.1} parent=1 // loop_pre_header
      _
    $region3: #{tpu_custom_call.1} parent=1 // loop_header
      %s26 = sphi 0, %s30
      %p27 = scmp.ge.s32.totalorder %s26, 8
      %s33 = sphi 0, %s45
      %s34 = sphi 0, %s41
      %s35 = sphi 0, %s33
      %s36 = sphi 0, %s34
      %s37 = sphi 0, %s35
      %s38 = sphi 0, %s36
      %s48 = sphi 0, %s50
      %s51 = sphi 0, %s48
      %s52 = sphi 0, %s51
      %s68 = sphi 0, %s52
      %s74 = sphi 0, %s76
      %s77 = sphi 0, %s74
      %s78 = sphi 0, %s77
      %s94 = sphi 0, %s78
      %s100 = sphi 0, %s102
      %s103 = sphi 0, %s100
      %s104 = sphi 0, %s103
      %s120 = sphi 0, %s104
      %s126 = sphi 0, %s128
      %s129 = sphi 0, %s126
      %s130 = sphi 0, %s129
      %s146 = sphi 0, %s130
      %s150 = sphi 0, %s150
      %s152 = sphi 0, %s150
      %s153 = sphi 0, %s152
      %s167 = sphi 0, %s153
      %s171 = sphi 0, %s171
      %s173 = sphi 0, %s171
      %s174 = sphi 0, %s173
      %s188 = sphi 0, %s174
      %s192 = sphi 0, %s192
      %s194 = sphi 0, %s192
      %s195 = sphi 0, %s194
      %s209 = sphi 0, %s195
      %s213 = sphi 0, %s213
      %s215 = sphi 0, %s213
      %s216 = sphi 0, %s215
      %s230 = sphi 0, %s216
      %s234 = sphi 0, %s234
      %s236 = sphi 0, %s234
      %s237 = sphi 0, %s236
      %s251 = sphi 0, %s237
      %s255 = sphi 0, %s255
      %s257 = sphi 0, %s255
      %s258 = sphi 0, %s257
      %s272 = sphi 0, %s258
      %s278 = sphi 0, %s280
      %s281 = sphi 0, %s278
      %s282 = sphi 0, %s281
      %s298 = sphi 0, %s282
    $region4: #{tpu_custom_call.1} parent=1 // loop_header_branch
      %29 = sbr.rel (%p27) target = $region8
    $region5: #{tpu_custom_call.1} parent=1 // loop_body
      %s31 = ssub.s32 %s26, 1
      %s32 = ssub.s32 %s26, 2
      %s39 = sadd.s32 1, %s34
      %p40 = scmp.ge.s32.totalorder %s39, 3
      %s41 = scalar_select %p40, 0, %s39
      %s42 = sadd.s32 1, %s33
      %s43 = scalar_select %p40, %s42, %s33
      %p44 = scmp.ge.s32.totalorder %s43, 2
      %s45 = scalar_select %p44, 0, %s43
      %s46 = ssub.s32 %s33, %s45
      %p47 = scmp.eq.s32.totalorder %s46, 0
      %s49 = sadd.s32 %s48, 1
      %s50 = scalar_select %p47, %s48, %s49
      %p53 = pneg %p47
      %p54 = scmp.eq.s32.totalorder %s26, 5
      %p55 = por %p53, %p54
      %p56 = scmp.ne.s32.totalorder %s48, %s51
      %p57 = scmp.eq.s32.totalorder %s26, 0
      %p58 = por %p56, %p57
      %p59 = scmp.ne.s32.totalorder %s48, %s51
      %p60 = scmp.eq.s32.totalorder %s31, 5
      %p61 = por %p59, %p60
      %p62 = scmp.ne.s32.totalorder %s51, %s52
      %p63 = scmp.eq.s32.totalorder %s31, 0
      %p64 = por %p62, %p63
      %p65 = scmp.ne.s32.totalorder %s51, %s52
      %p66 = scmp.eq.s32.totalorder %s32, 5
      %p67 = por %p65, %p66
      %p69 = scmp.ne.s32.totalorder %s52, %s68
      %p70 = scmp.eq.s32.totalorder %s32, 0
      %p71 = por %p69, %p70
      %s72 = ssub.s32 %s33, %s45
      %p73 = scmp.eq.s32.totalorder %s72, 0
      %s75 = sadd.s32 %s74, 1
      %s76 = scalar_select %p73, %s74, %s75
      %p79 = pneg %p73
      %p80 = scmp.eq.s32.totalorder %s26, 5
      %p81 = por %p79, %p80
      %p82 = scmp.ne.s32.totalorder %s74, %s77
      %p83 = scmp.eq.s32.totalorder %s26, 0
      %p84 = por %p82, %p83
      %p85 = scmp.ne.s32.totalorder %s74, %s77
      %p86 = scmp.eq.s32.totalorder %s31, 5
      %p87 = por %p85, %p86
      %p88 = scmp.ne.s32.totalorder %s77, %s78
      %p89 = scmp.eq.s32.totalorder %s31, 0
      %p90 = por %p88, %p89
      %p91 = scmp.ne.s32.totalorder %s77, %s78
      %p92 = scmp.eq.s32.totalorder %s32, 5
      %p93 = por %p91, %p92
      %p95 = scmp.ne.s32.totalorder %s78, %s94
      %p96 = scmp.eq.s32.totalorder %s32, 0
      %p97 = por %p95, %p96
      %s98 = ssub.s32 %s33, %s45
      %p99 = scmp.eq.s32.totalorder %s98, 0
      %s101 = sadd.s32 %s100, 1
      %s102 = scalar_select %p99, %s100, %s101
      %p105 = pneg %p99
      %p106 = scmp.eq.s32.totalorder %s26, 5
      %p107 = por %p105, %p106
      %p108 = scmp.ne.s32.totalorder %s100, %s103
      %p109 = scmp.eq.s32.totalorder %s26, 0
      %p110 = por %p108, %p109
      %p111 = scmp.ne.s32.totalorder %s100, %s103
      %p112 = scmp.eq.s32.totalorder %s31, 5
      %p113 = por %p111, %p112
      %p114 = scmp.ne.s32.totalorder %s103, %s104
      %p115 = scmp.eq.s32.totalorder %s31, 0
      %p116 = por %p114, %p115
      %p117 = scmp.ne.s32.totalorder %s103, %s104
      %p118 = scmp.eq.s32.totalorder %s32, 5
      %p119 = por %p117, %p118
      %p121 = scmp.ne.s32.totalorder %s104, %s120
      %p122 = scmp.eq.s32.totalorder %s32, 0
      %p123 = por %p121, %p122
      %s124 = ssub.s32 %s34, %s41
      %p125 = scmp.eq.s32.totalorder %s124, 0
      %s127 = sadd.s32 %s126, 1
      %s128 = scalar_select %p125, %s126, %s127
      %p131 = pneg %p125
      %p132 = scmp.eq.s32.totalorder %s26, 5
      %p133 = por %p131, %p132
      %p134 = scmp.ne.s32.totalorder %s126, %s129
      %p135 = scmp.eq.s32.totalorder %s26, 0
      %p136 = por %p134, %p135
      %p137 = scmp.ne.s32.totalorder %s126, %s129
      %p138 = scmp.eq.s32.totalorder %s31, 5
      %p139 = por %p137, %p138
      %p140 = scmp.ne.s32.totalorder %s129, %s130
      %p141 = scmp.eq.s32.totalorder %s31, 0
      %p142 = por %p140, %p141
      %p143 = scmp.ne.s32.totalorder %s129, %s130
      %p144 = scmp.eq.s32.totalorder %s32, 5
      %p145 = por %p143, %p144
      %p147 = scmp.ne.s32.totalorder %s130, %s146
      %p148 = scmp.eq.s32.totalorder %s32, 0
      %p149 = por %p147, %p148
      %s151 = sadd.s32 %s150, 1
      %p154 = scmp.eq.s32.totalorder %s26, 5
      %p155 = scmp.ne.s32.totalorder %s150, %s152
      %p156 = scmp.eq.s32.totalorder %s26, 0
      %p157 = por %p155, %p156
      %p158 = scmp.ne.s32.totalorder %s150, %s152
      %p159 = scmp.eq.s32.totalorder %s31, 5
      %p160 = por %p158, %p159
      %p161 = scmp.ne.s32.totalorder %s152, %s153
      %p162 = scmp.eq.s32.totalorder %s31, 0
      %p163 = por %p161, %p162
      %p164 = scmp.ne.s32.totalorder %s152, %s153
      %p165 = scmp.eq.s32.totalorder %s32, 5
      %p166 = por %p164, %p165
      %p168 = scmp.ne.s32.totalorder %s153, %s167
      %p169 = scmp.eq.s32.totalorder %s32, 0
      %p170 = por %p168, %p169
      %s172 = sadd.s32 %s171, 1
      %p175 = scmp.eq.s32.totalorder %s26, 5
      %p176 = scmp.ne.s32.totalorder %s171, %s173
      %p177 = scmp.eq.s32.totalorder %s26, 0
      %p178 = por %p176, %p177
      %p179 = scmp.ne.s32.totalorder %s171, %s173
      %p180 = scmp.eq.s32.totalorder %s31, 5
      %p181 = por %p179, %p180
      %p182 = scmp.ne.s32.totalorder %s173, %s174
      %p183 = scmp.eq.s32.totalorder %s31, 0
      %p184 = por %p182, %p183
      %p185 = scmp.ne.s32.totalorder %s173, %s174
      %p186 = scmp.eq.s32.totalorder %s32, 5
      %p187 = por %p185, %p186
      %p189 = scmp.ne.s32.totalorder %s174, %s188
      %p190 = scmp.eq.s32.totalorder %s32, 0
      %p191 = por %p189, %p190
      %s193 = sadd.s32 %s192, 1
      %p196 = scmp.eq.s32.totalorder %s26, 5
      %p197 = scmp.ne.s32.totalorder %s192, %s194
      %p198 = scmp.eq.s32.totalorder %s26, 0
      %p199 = por %p197, %p198
      %p200 = scmp.ne.s32.totalorder %s192, %s194
      %p201 = scmp.eq.s32.totalorder %s31, 5
      %p202 = por %p200, %p201
      %p203 = scmp.ne.s32.totalorder %s194, %s195
      %p204 = scmp.eq.s32.totalorder %s31, 0
      %p205 = por %p203, %p204
      %p206 = scmp.ne.s32.totalorder %s194, %s195
      %p207 = scmp.eq.s32.totalorder %s32, 5
      %p208 = por %p206, %p207
      %p210 = scmp.ne.s32.totalorder %s195, %s209
      %p211 = scmp.eq.s32.totalorder %s32, 0
      %p212 = por %p210, %p211
      %s214 = sadd.s32 %s213, 1
      %p217 = scmp.eq.s32.totalorder %s26, 5
      %p218 = scmp.ne.s32.totalorder %s213, %s215
      %p219 = scmp.eq.s32.totalorder %s26, 0
      %p220 = por %p218, %p219
      %p221 = scmp.ne.s32.totalorder %s213, %s215
      %p222 = scmp.eq.s32.totalorder %s31, 5
      %p223 = por %p221, %p222
      %p224 = scmp.ne.s32.totalorder %s215, %s216
      %p225 = scmp.eq.s32.totalorder %s31, 0
      %p226 = por %p224, %p225
      %p227 = scmp.ne.s32.totalorder %s215, %s216
      %p228 = scmp.eq.s32.totalorder %s32, 5
      %p229 = por %p227, %p228
      %p231 = scmp.ne.s32.totalorder %s216, %s230
      %p232 = scmp.eq.s32.totalorder %s32, 0
      %p233 = por %p231, %p232
      %s235 = sadd.s32 %s234, 1
      %p238 = scmp.eq.s32.totalorder %s26, 5
      %p239 = scmp.ne.s32.totalorder %s234, %s236
      %p240 = scmp.eq.s32.totalorder %s26, 0
      %p241 = por %p239, %p240
      %p242 = scmp.ne.s32.totalorder %s234, %s236
      %p243 = scmp.eq.s32.totalorder %s31, 5
      %p244 = por %p242, %p243
      %p245 = scmp.ne.s32.totalorder %s236, %s237
      %p246 = scmp.eq.s32.totalorder %s31, 0
      %p247 = por %p245, %p246
      %p248 = scmp.ne.s32.totalorder %s236, %s237
      %p249 = scmp.eq.s32.totalorder %s32, 5
      %p250 = por %p248, %p249
      %p252 = scmp.ne.s32.totalorder %s237, %s251
      %p253 = scmp.eq.s32.totalorder %s32, 0
      %p254 = por %p252, %p253
      %s256 = sadd.s32 %s255, 1
      %p259 = scmp.eq.s32.totalorder %s26, 5
      %p260 = scmp.ne.s32.totalorder %s255, %s257
      %p261 = scmp.eq.s32.totalorder %s26, 0
      %p262 = por %p260, %p261
      %p263 = scmp.ne.s32.totalorder %s255, %s257
      %p264 = scmp.eq.s32.totalorder %s31, 5
      %p265 = por %p263, %p264
      %p266 = scmp.ne.s32.totalorder %s257, %s258
      %p267 = scmp.eq.s32.totalorder %s31, 0
      %p268 = por %p266, %p267
      %p269 = scmp.ne.s32.totalorder %s257, %s258
      %p270 = scmp.eq.s32.totalorder %s32, 5
      %p271 = por %p269, %p270
      %p273 = scmp.ne.s32.totalorder %s258, %s272
      %p274 = scmp.eq.s32.totalorder %s32, 0
      %p275 = por %p273, %p274
      %s276 = ssub.s32 %s33, %s45
      %p277 = scmp.eq.s32.totalorder %s276, 0
      %s279 = sadd.s32 %s278, 1
      %s280 = scalar_select %p277, %s278, %s279
      %p283 = pneg %p277
      %p284 = scmp.eq.s32.totalorder %s26, 5
      %p285 = por %p283, %p284
      %p286 = scmp.ne.s32.totalorder %s278, %s281
      %p287 = scmp.eq.s32.totalorder %s26, 0
      %p288 = por %p286, %p287
      %p289 = scmp.ne.s32.totalorder %s278, %s281
      %p290 = scmp.eq.s32.totalorder %s31, 5
      %p291 = por %p289, %p290
      %p292 = scmp.ne.s32.totalorder %s281, %s282
      %p293 = scmp.eq.s32.totalorder %s31, 0
      %p294 = por %p292, %p293
      %p295 = scmp.ne.s32.totalorder %s281, %s282
      %p296 = scmp.eq.s32.totalorder %s32, 5
      %p297 = por %p295, %p296
      %p299 = scmp.ne.s32.totalorder %s282, %s298
      %p300 = scmp.eq.s32.totalorder %s32, 0
      %p301 = por %p299, %p300
      %p302 = scmp.le.s32.totalorder 1, %s26
      %p303 = scmp.lt.s32.totalorder %s26, 7
      %p304 = pnand %p302, %p303
      %p305 = pneg %p304
      // Predicated region
      $region9: #{tpu_custom_call.1} parent=5 // pred_check
        _
      $region10: #{tpu_custom_call.1} parent=5 // pred_check_branch
        %307 = sbr.rel (%p304) target = $region12
      $region11: #{tpu_custom_call.1} parent=5 // pred_region
        %s308 = ssub.s32 %s26, 1
        // Predicated region
        $region13: #{tpu_custom_call.1} parent=11 // pred_check
          %p309 = pneg %p163
        $region14: #{tpu_custom_call.1} parent=11 // pred_check_branch
          %311 = sbr.rel (%p309) target = $region16
        $region15: #{tpu_custom_call.1} parent=11 // pred_region
          %313 = vsyncadd [#allocation7], 0
          %s314 = sshll.u32 %s4, 4
          %s315 = int_to_ptr.hbm [resolvable:$true] %s314
          %s316 = sshll.u32 [#allocation8], 4
          %s317 = int_to_ptr.vmem [resolvable:$true] %s316
          %322 = dma.hbm_to_vmem [thread:$0]  %s315, 1024, %s317, [#allocation7], 64, 64, 4
        $region16: #{tpu_custom_call.1} parent=11 // pred_fallthru
          _
        // Predicated region
        $region17: #{tpu_custom_call.1} parent=11 // pred_check
          %p323 = pneg %p184
        $region18: #{tpu_custom_call.1} parent=11 // pred_check_branch
          %325 = sbr.rel (%p323) target = $region20
        $region19: #{tpu_custom_call.1} parent=11 // pred_region
          _
        $region20: #{tpu_custom_call.1} parent=11 // pred_fallthru
          _
        // Predicated region
        $region21: #{tpu_custom_call.1} parent=11 // pred_check
          %p326 = pneg %p205
        $region22: #{tpu_custom_call.1} parent=11 // pred_check_branch
          %328 = sbr.rel (%p326) target = $region24
        $region23: #{tpu_custom_call.1} parent=11 // pred_region
          %330 = vsyncadd [#allocation10], 0
          %s331 = sshll.u32 %s6, 4
          %s332 = int_to_ptr.hbm [resolvable:$true] %s331
          %s333 = sshll.u32 [#allocation9], 4
          %s334 = int_to_ptr.vmem [resolvable:$true] %s333
          %339 = dma.hbm_to_vmem [thread:$0]  %s332, 1024, %s334, [#allocation10], 64, 64, 4
        $region24: #{tpu_custom_call.1} parent=11 // pred_fallthru
          _
        // Predicated region
        $region25: #{tpu_custom_call.1} parent=11 // pred_check
          %p340 = pneg %p226
        $region26: #{tpu_custom_call.1} parent=11 // pred_check_branch
          %342 = sbr.rel (%p340) target = $region28
        $region27: #{tpu_custom_call.1} parent=11 // pred_region
          _
        $region28: #{tpu_custom_call.1} parent=11 // pred_fallthru
          _
        // Predicated region
        $region29: #{tpu_custom_call.1} parent=11 // pred_check
          %p343 = pneg %p247
        $region30: #{tpu_custom_call.1} parent=11 // pred_check_branch
          %345 = sbr.rel (%p343) target = $region32
        $region31: #{tpu_custom_call.1} parent=11 // pred_region
          %347 = vsyncadd [#allocation10], 0
          %s348 = sshll.u32 %s8, 4
          %s349 = int_to_ptr.hbm [resolvable:$true] %s348
          %s350 = sshll.u32 [#allocation11], 4
          %s351 = int_to_ptr.vmem [resolvable:$true] %s350
          %356 = dma.hbm_to_vmem [thread:$0]  %s349, 1024, %s351, [#allocation10], 64, 64, 4
        $region32: #{tpu_custom_call.1} parent=11 // pred_fallthru
          _
        // Predicated region
        $region33: #{tpu_custom_call.1} parent=11 // pred_check
          %p357 = pneg %p268
        $region34: #{tpu_custom_call.1} parent=11 // pred_check_branch
          %359 = sbr.rel (%p357) target = $region36
        $region35: #{tpu_custom_call.1} parent=11 // pred_region
          _
        $region36: #{tpu_custom_call.1} parent=11 // pred_fallthru
          _
      $region12: #{tpu_custom_call.1} parent=5 // pred_fallthru
        _
      %p360 = scmp.lt.s32.totalorder %s26, 6
      // Predicated region
      $region37: #{tpu_custom_call.1} parent=5 // pred_check
        %p361 = pneg %p360
      $region38: #{tpu_custom_call.1} parent=5 // pred_check_branch
        %363 = sbr.rel (%p361) target = $region40
      $region39: #{tpu_custom_call.1} parent=5 // pred_region
        // Predicated region
        $region41: #{tpu_custom_call.1} parent=39 // pred_check
          %p364 = pneg %p58
        $region42: #{tpu_custom_call.1} parent=39 // pred_check_branch
          %366 = sbr.rel (%p364) target = $region44
        $region43: #{tpu_custom_call.1} parent=39 // pred_region
          %p367 = scmp.lt.s32.totalorder %s33, 1
          %s368 = scalar_select %p367, %s33, 1
          %s369 = smul.addr %s368, 8
          %s370 = scalar_lea.vmem %s0, %s369
        $region44: #{tpu_custom_call.1} parent=39 // pred_fallthru
          _
        // Predicated region
        $region45: #{tpu_custom_call.1} parent=39 // pred_check
          %p371 = pneg %p84
        $region46: #{tpu_custom_call.1} parent=39 // pred_check_branch
          %373 = sbr.rel (%p371) target = $region48
        $region47: #{tpu_custom_call.1} parent=39 // pred_region
          %s374 = sand.u32 %s74, 1
          %s375 = scalar_lea.sflag [#allocation4], %s374
          %s376 = sand.u32 %s74, 1
          %s377 = smul.addr %s376, 8
          %s378 = scalar_lea.vmem [#allocation3], %s377
          %380 = vsyncadd %s375, 0
          %s381 = smul.addr %s33, 8
          %s382 = scalar_lea.hbm %s1, %s381
          %s384 = sshll.u32 %s382, 4
          %s385 = int_to_ptr.hbm [resolvable:$true] %s384
          %s386 = sshll.u32 %s378, 4
          %s387 = int_to_ptr.vmem [resolvable:$true] %s386
          %389 = dma.hbm_to_vmem [thread:$0]  %s385, 128, %s387, %s375
        $region48: #{tpu_custom_call.1} parent=39 // pred_fallthru
          _
        // Predicated region
        $region49: #{tpu_custom_call.1} parent=39 // pred_check
          %p390 = pneg %p110
        $region50: #{tpu_custom_call.1} parent=39 // pred_check_branch
          %392 = sbr.rel (%p390) target = $region52
        $region51: #{tpu_custom_call.1} parent=39 // pred_region
          %p393 = scmp.lt.s32.totalorder %s33, 1
          %s394 = scalar_select %p393, %s33, 1
          %s395 = smul.addr %s394, 8
          %s396 = scalar_lea.vmem %s2, %s395
        $region52: #{tpu_custom_call.1} parent=39 // pred_fallthru
          _
        // Predicated region
        $region53: #{tpu_custom_call.1} parent=39 // pred_check
          %p397 = pneg %p136
        $region54: #{tpu_custom_call.1} parent=39 // pred_check_branch
          %399 = sbr.rel (%p397) target = $region56
        $region55: #{tpu_custom_call.1} parent=39 // pred_region
          %s400 = sand.u32 %s26, 1
          %s401 = scalar_lea.sflag [#allocation7], %s400
          %s402 = sand.u32 %s126, 1
          %s403 = smul.addr %s402, 64
          %s404 = scalar_lea.vmem [#allocation6], %s403
          %s405 = smul.u32 16, %s34
          %407 = vsyncadd %s401, 0
          %s408 = smul.addr %s405, 4
          %s409 = scalar_lea.hbm %s3, %s408
          %s410 = sshll.u32 %s409, 4
          %s411 = int_to_ptr.hbm [resolvable:$true] %s410
          %s412 = sshll.u32 %s404, 4
          %s413 = int_to_ptr.vmem [resolvable:$true] %s412
          %418 = dma.hbm_to_vmem [thread:$0]  %s411, 1024, %s413, %s401, 64, 64, 4
        $region56: #{tpu_custom_call.1} parent=39 // pred_fallthru
          _
      $region40: #{tpu_custom_call.1} parent=5 // pred_fallthru
        _
      %p419 = scmp.le.s32.totalorder 1, %s26
      %p420 = scmp.lt.s32.totalorder %s26, 7
      %p421 = pnand %p419, %p420
      %p422 = pneg %p421
      // Predicated region
      $region57: #{tpu_custom_call.1} parent=5 // pred_check
        _
      $region58: #{tpu_custom_call.1} parent=5 // pred_check_branch
        %424 = sbr.rel (%p421) target = $region60
      $region59: #{tpu_custom_call.1} parent=5 // pred_region
        %s425 = ssub.s32 %s26, 1
        %s426 = sand.u32 %s77, 1
        %s427 = scalar_lea.sflag [#allocation4], %s426
        %s428 = sand.u32 %s77, 1
        %s429 = smul.addr %s428, 8
        %s430 = scalar_lea.vmem [#allocation3], %s429
        // Predicated region
        $region61: #{tpu_custom_call.1} parent=59 // pred_check
          %p431 = pneg %p90
        $region62: #{tpu_custom_call.1} parent=59 // pred_check_branch
          %433 = sbr.rel (%p431) target = $region64
        $region63: #{tpu_custom_call.1} parent=59 // pred_region
          %435 = dma.done %s427, 128
        $region64: #{tpu_custom_call.1} parent=59 // pred_fallthru
          _
        %s436 = sand.u32 %s31, 1
        %s437 = scalar_lea.sflag [#allocation7], %s436
        %s438 = sand.u32 %s129, 1
        %s439 = smul.addr %s438, 64
        %s440 = scalar_lea.vmem [#allocation6], %s439
        // Predicated region
        $region65: #{tpu_custom_call.1} parent=59 // pred_check
          %p441 = pneg %p142
        $region66: #{tpu_custom_call.1} parent=59 // pred_check_branch
          %443 = sbr.rel (%p441) target = $region68
        $region67: #{tpu_custom_call.1} parent=59 // pred_region
          %445 = dma.done %s437, 1024
        $region68: #{tpu_custom_call.1} parent=59 // pred_fallthru
          _
        // Predicated region
        $region69: #{tpu_custom_call.1} parent=59 // pred_check
          %p446 = pneg %p163
        $region70: #{tpu_custom_call.1} parent=59 // pred_check_branch
          %448 = sbr.rel (%p446) target = $region72
        $region71: #{tpu_custom_call.1} parent=59 // pred_region
          %450 = dma.done [#allocation7], 1024
        $region72: #{tpu_custom_call.1} parent=59 // pred_fallthru
          _
        // Predicated region
        $region73: #{tpu_custom_call.1} parent=59 // pred_check
          %p451 = pneg %p205
        $region74: #{tpu_custom_call.1} parent=59 // pred_check_branch
          %453 = sbr.rel (%p451) target = $region76
        $region75: #{tpu_custom_call.1} parent=59 // pred_region
          %455 = dma.done [#allocation10], 1024
        $region76: #{tpu_custom_call.1} parent=59 // pred_fallthru
          _
        // Predicated region
        $region77: #{tpu_custom_call.1} parent=59 // pred_check
          %p456 = pneg %p247
        $region78: #{tpu_custom_call.1} parent=59 // pred_check_branch
          %458 = sbr.rel (%p456) target = $region80
        $region79: #{tpu_custom_call.1} parent=59 // pred_region
          %460 = dma.done [#allocation10], 1024
        $region80: #{tpu_custom_call.1} parent=59 // pred_fallthru
          _
        %p461 = scmp.lt.s32.totalorder %s35, 1
        %s462 = scalar_select %p461, %s35, 1
        %s463 = smul.addr %s462, 8
        %s464 = scalar_lea.vmem %s0, %s463
        %p465 = pneg %p64
        %p466 = pneg %p61
        %s467 = sand.u32 %s77, 1
        %s468 = scalar_lea.sflag [#allocation4], %s467
        %s469 = sand.u32 %s77, 1
        %s470 = smul.addr %s469, 8
        %s471 = scalar_lea.vmem [#allocation3], %s470
        %p472 = pneg %p90
        %p473 = pneg %p87
        %p474 = scmp.lt.s32.totalorder %s35, 1
        %s475 = scalar_select %p474, %s35, 1
        %s476 = smul.addr %s475, 8
        %s477 = scalar_lea.vmem %s2, %s476
        %p478 = pneg %p116
        %p479 = pneg %p113
        %s480 = sand.u32 %s31, 1
        %s481 = scalar_lea.sflag [#allocation7], %s480
        %s482 = sand.u32 %s129, 1
        %s483 = smul.addr %s482, 64
        %s484 = scalar_lea.vmem [#allocation6], %s483
        %p485 = pneg %p142
        %p486 = pneg %p139
        %p487 = pneg %p163
        %p488 = pneg %p160
        %p489 = pneg %p184
        %p490 = pneg %p181
        %p491 = pneg %p205
        %p492 = pneg %p202
        %p493 = pneg %p226
        %p494 = pneg %p223
        %p495 = pneg %p247
        %p496 = pneg %p244
        %p497 = pneg %p268
        %p498 = pneg %p265
        %p499 = pneg %p294
        %p500 = pneg %p291
        %s501 = sand.u32 %s281, 1
        %s502 = scalar_lea.sflag [#allocation5], %s501
        %s503 = sand.u32 %s281, 1
        %s504 = smul.addr %s503, 16
        %s505 = scalar_lea.vmem [#allocation12], %s504
        %p506 = scmp.lt.s32.totalorder %s35, 1
        %s507 = scalar_select %p506, %s35, 1
        %s508 = smul.addr %s507, 8
        %s509 = scalar_lea.vmem %s0, %s508
        %p510 = scmp.lt.s32.totalorder %s35, 1
        %s511 = scalar_select %p510, %s35, 1
        %s512 = smul.addr %s511, 8
        %s513 = scalar_lea.vmem %s2, %s512
        %s514 = smul.u32 16, %s36
        %p515 = scmp.eq.s32.totalorder %s36, 0
        // Predicated region
        $region81: #{tpu_custom_call.1} parent=59 // pred_check
          %p516 = pneg %p515
        $region82: #{tpu_custom_call.1} parent=59 // pred_check_branch
          %518 = sbr.rel (%p516) target = $region84
        $region83: #{tpu_custom_call.1} parent=59 // pred_region
          %519 = vst [vmem:[#allocation2] sm:$0xff] 0.0
        $region84: #{tpu_custom_call.1} parent=59 // pred_fallthru
          _
        %v520 = vld [vmem:[%s509] sm:$0xff]
        %v521 = vld [vmem:[%s430] sm:$0xff]
        %vm522 = vcmask 80896
        %v523 = vsel %vm522, %v521, 0.0
        %524 = vadd.xlane.f32.xlu0 %v523
        %v525 = vpop.xlane.xlu0 %524
        %v526 = vrcp.pop %v525
        %v527 = vmul.f32 %v525, %v526
        %v528 = vsub.f32 1.0, %v527
        %v529 = vmul.f32 %v526, %v528
        %v530 = vadd.f32 %v526, %v529
        %vm531 = vweird.f32 %v525
        %vm532 = vweird.f32 %v526
        %vm533 = vmor %vm531, %vm532
        %v534 = vsel %vm533, %v526, %v530
        %v535 = vand.u32 2147483647, %v525
        %vm536 = vcmp.eq.f32.partialorder %v535, 8.507059e+37
        %v537 = vand.u32 %v525, 2147483648
        %v538 = vor.u32 1.1754944e-38, %v537
        %v539 = vsel %vm536, %v538, %v534
        %v540 = vmul.f32 %v521, %v539
        %s541 = smul.u32 %s36, 128
        %v542 = vlaneseq
        %v543 = vand.u32 %v542, 127
        %v544 = vstv %s541
        %v545 = vadd.s32 %v544, %v543
        %546 = vset.pattern.permute.xlu0 0
        %547 = vperm.xlu0 %546, %v520
        %v548 = vpop.permute.xlu0 %547
        %vm549 = vcmp.eq.s32.totalorder %v548, %v545
        %551 = vset.pattern.permute.xlu0 0
        %552 = vperm.xlu0 %551, %v540
        %v553 = vpop.permute.xlu0 %552
        %v555 = vsel %vm549, %v553, 0.0
        %v556 = vadd.f32 %v555, 0.0
        %557 = vset.pattern.permute.xlu0 1
        %558 = vperm.xlu0 %557, %v520
        %v559 = vpop.permute.xlu0 %558
        %vm560 = vcmp.eq.s32.totalorder %v559, %v545
        %561 = vset.pattern.permute.xlu0 1
        %562 = vperm.xlu0 %561, %v540
        %v563 = vpop.permute.xlu0 %562
        %v565 = vsel %vm560, %v563, 0.0
        %v566 = vadd.f32 %v556, %v565
        %567 = vset.pattern.permute.xlu0 2
        %568 = vperm.xlu0 %567, %v520
        %v569 = vpop.permute.xlu0 %568
        %vm570 = vcmp.eq.s32.totalorder %v569, %v545
        %571 = vset.pattern.permute.xlu0 2
        %572 = vperm.xlu0 %571, %v540
        %v573 = vpop.permute.xlu0 %572
        %v575 = vsel %vm570, %v573, 0.0
        %v576 = vadd.f32 %v566, %v575
        %577 = vset.pattern.permute.xlu0 3
        %578 = vperm.xlu0 %577, %v520
        %v579 = vpop.permute.xlu0 %578
        %vm580 = vcmp.eq.s32.totalorder %v579, %v545
        %581 = vset.pattern.permute.xlu0 3
        %582 = vperm.xlu0 %581, %v540
        %v583 = vpop.permute.xlu0 %582
        %v585 = vsel %vm580, %v583, 0.0
        %v586 = vadd.f32 %v576, %v585
        %587 = vset.pattern.permute.xlu0 4
        %588 = vperm.xlu0 %587, %v520
        %v589 = vpop.permute.xlu0 %588
        %vm590 = vcmp.eq.s32.totalorder %v589, %v545
        %591 = vset.pattern.permute.xlu0 4
        %592 = vperm.xlu0 %591, %v540
        %v593 = vpop.permute.xlu0 %592
        %v595 = vsel %vm590, %v593, 0.0
        %v596 = vadd.f32 %v586, %v595
        %597 = vset.pattern.permute.xlu0 5
        %598 = vperm.xlu0 %597, %v520
        %v599 = vpop.permute.xlu0 %598
        %vm600 = vcmp.eq.s32.totalorder %v599, %v545
        %601 = vset.pattern.permute.xlu0 5
        %602 = vperm.xlu0 %601, %v540
        %v603 = vpop.permute.xlu0 %602
        %v605 = vsel %vm600, %v603, 0.0
        %v606 = vadd.f32 %v596, %v605
        %607 = vset.pattern.permute.xlu0 6
        %608 = vperm.xlu0 %607, %v520
        %v609 = vpop.permute.xlu0 %608
        %vm610 = vcmp.eq.s32.totalorder %v609, %v545
        %611 = vset.pattern.permute.xlu0 6
        %612 = vperm.xlu0 %611, %v540
        %v613 = vpop.permute.xlu0 %612
        %v615 = vsel %vm610, %v613, 0.0
        %v616 = vadd.f32 %v606, %v615
        %617 = vset.pattern.permute.xlu0 7
        %618 = vperm.xlu0 %617, %v520
        %v619 = vpop.permute.xlu0 %618
        %vm620 = vcmp.eq.s32.totalorder %v619, %v545
        %621 = vset.pattern.permute.xlu0 7
        %622 = vperm.xlu0 %621, %v540
        %v623 = vpop.permute.xlu0 %622
        %v625 = vsel %vm620, %v623, 0.0
        %v626 = vadd.f32 %v616, %v625
        %627 = vset.pattern.permute.xlu0 8
        %628 = vperm.xlu0 %627, %v520
        %v629 = vpop.permute.xlu0 %628
        %vm630 = vcmp.eq.s32.totalorder %v629, %v545
        %631 = vset.pattern.permute.xlu0 8
        %632 = vperm.xlu0 %631, %v540
        %v633 = vpop.permute.xlu0 %632
        %v635 = vsel %vm630, %v633, 0.0
        %v636 = vadd.f32 %v626, %v635
        %637 = vset.pattern.permute.xlu0 9
        %638 = vperm.xlu0 %637, %v520
        %v639 = vpop.permute.xlu0 %638
        %vm640 = vcmp.eq.s32.totalorder %v639, %v545
        %641 = vset.pattern.permute.xlu0 9
        %642 = vperm.xlu0 %641, %v540
        %v643 = vpop.permute.xlu0 %642
        %v645 = vsel %vm640, %v643, 0.0
        %v646 = vadd.f32 %v636, %v645
        %v647 = vld [vmem:[#allocation2] sm:$0xff]
        %v648 = vpack.c.bf16 %v646, %v646
        %v649 = vld [vmem:[%s440] sm:$0xf]
        %v650 = vld [vmem:[%s440 + $0x4] sm:$0xf]
        %v651 = vld [vmem:[%s440 + $0x8] sm:$0xf]
        %v652 = vld [vmem:[%s440 + $0xc] sm:$0xf]
        %v653 = vld [vmem:[%s440 + $0x10] sm:$0xf]
        %v654 = vld [vmem:[%s440 + $0x14] sm:$0xf]
        %v655 = vld [vmem:[%s440 + $0x18] sm:$0xf]
        %v656 = vld [vmem:[%s440 + $0x1c] sm:$0xf]
        %v657 = vld [vmem:[%s440 + $0x20] sm:$0xf]
        %v658 = vld [vmem:[%s440 + $0x24] sm:$0xf]
        %v659 = vld [vmem:[%s440 + $0x28] sm:$0xf]
        %v660 = vld [vmem:[%s440 + $0x2c] sm:$0xf]
        %v661 = vld [vmem:[%s440 + $0x30] sm:$0xf]
        %v662 = vld [vmem:[%s440 + $0x34] sm:$0xf]
        %v663 = vld [vmem:[%s440 + $0x38] sm:$0xf]
        %v664 = vld [vmem:[%s440 + $0x3c] sm:$0xf]
        %v681 = vunpack.c.l.b16 %v649
        %v682 = vunpack.c.l.b16 %v650
        %v683 = vunpack.c.l.b16 %v651
        %v684 = vunpack.c.l.b16 %v652
        %v685 = vunpack.c.l.b16 %v653
        %v686 = vunpack.c.l.b16 %v654
        %v687 = vunpack.c.l.b16 %v655
        %v688 = vunpack.c.l.b16 %v656
        %v689 = vunpack.c.l.b16 %v657
        %v690 = vunpack.c.l.b16 %v658
        %v691 = vunpack.c.l.b16 %v659
        %v692 = vunpack.c.l.b16 %v660
        %v693 = vunpack.c.l.b16 %v661
        %v694 = vunpack.c.l.b16 %v662
        %v695 = vunpack.c.l.b16 %v663
        %v696 = vunpack.c.l.b16 %v664
        %v697 = vpack.c.b16 %v682, %v681
        %v698 = vpack.c.b16 %v684, %v683
        %v699 = vpack.c.b16 %v686, %v685
        %v700 = vpack.c.b16 %v688, %v687
        %v701 = vpack.c.b16 %v690, %v689
        %v702 = vpack.c.b16 %v692, %v691
        %v703 = vpack.c.b16 %v694, %v693
        %v704 = vpack.c.b16 %v696, %v695
        %713 = vmatpush.bf16.msra.mxu0 %v704
        %714 = vmatpush.bf16.msra.mxu0 %v703
        %715 = vmatpush.bf16.msra.mxu0 %v702
        %716 = vmatpush.bf16.msra.mxu0 %v701
        %717 = vmatpush.bf16.msra.mxu0 %v700
        %718 = vmatpush.bf16.msra.mxu0 %v699
        %719 = vmatpush.bf16.msra.mxu0 %v698
        %720 = vmatpush.bf16.msra.mxu0 %v697
        %721 = vmatmul.bf16.gmra.mxu0 %v648
        %v722 = vpop.f32.mrf.mxu0
        %v723 = vadd.f32 0.0, %v722
        %v724 = vpop.f32.mrf.mxu0
        %725 = vdwg.mxu0
        %v726 = vadd.f32 %v647, %v723
        %727 = vst [vmem:[#allocation2] sm:$0xff] %v726
        %p728 = scmp.eq.s32.totalorder %s36, 2
        // Predicated region
        $region85: #{tpu_custom_call.1} parent=59 // pred_check
          %p729 = pneg %p728
        $region86: #{tpu_custom_call.1} parent=59 // pred_check_branch
          %731 = sbr.rel (%p729) target = $region88
        $region87: #{tpu_custom_call.1} parent=59 // pred_region
          %v732 = vld [vmem:[#allocation2] sm:$0xff]
          %v733 = vpack.c.bf16 %v732, %v732
          %v734 = vld [vmem:[#allocation8] sm:$0xf]
          %v735 = vld [vmem:[#allocation8 + $0x4] sm:$0xf]
          %v736 = vld [vmem:[#allocation8 + $0x8] sm:$0xf]
          %v737 = vld [vmem:[#allocation8 + $0xc] sm:$0xf]
          %v738 = vld [vmem:[#allocation8 + $0x10] sm:$0xf]
          %v739 = vld [vmem:[#allocation8 + $0x14] sm:$0xf]
          %v740 = vld [vmem:[#allocation8 + $0x18] sm:$0xf]
          %v741 = vld [vmem:[#allocation8 + $0x1c] sm:$0xf]
          %v742 = vld [vmem:[#allocation8 + $0x20] sm:$0xf]
          %v743 = vld [vmem:[#allocation8 + $0x24] sm:$0xf]
          %v744 = vld [vmem:[#allocation8 + $0x28] sm:$0xf]
          %v745 = vld [vmem:[#allocation8 + $0x2c] sm:$0xf]
          %v746 = vld [vmem:[#allocation8 + $0x30] sm:$0xf]
          %v747 = vld [vmem:[#allocation8 + $0x34] sm:$0xf]
          %v748 = vld [vmem:[#allocation8 + $0x38] sm:$0xf]
          %v749 = vld [vmem:[#allocation8 + $0x3c] sm:$0xf]
          %v750 = vld [vmem:[%s5] sm:$0x1]
          %v752 = vperm.slane %v750, 0
          %v770 = vunpack.c.l.b16 %v734
          %v771 = vunpack.c.l.b16 %v735
          %v772 = vunpack.c.l.b16 %v736
          %v773 = vunpack.c.l.b16 %v737
          %v774 = vunpack.c.l.b16 %v738
          %v775 = vunpack.c.l.b16 %v739
          %v776 = vunpack.c.l.b16 %v740
          %v777 = vunpack.c.l.b16 %v741
          %v778 = vunpack.c.l.b16 %v742
          %v779 = vunpack.c.l.b16 %v743
          %v780 = vunpack.c.l.b16 %v744
          %v781 = vunpack.c.l.b16 %v745
          %v782 = vunpack.c.l.b16 %v746
          %v783 = vunpack.c.l.b16 %v747
          %v784 = vunpack.c.l.b16 %v748
          %v785 = vunpack.c.l.b16 %v749
          %v786 = vpack.c.b16 %v771, %v770
          %v787 = vpack.c.b16 %v773, %v772
          %v788 = vpack.c.b16 %v775, %v774
          %v789 = vpack.c.b16 %v777, %v776
          %v790 = vpack.c.b16 %v779, %v778
          %v791 = vpack.c.b16 %v781, %v780
          %v792 = vpack.c.b16 %v783, %v782
          %v793 = vpack.c.b16 %v785, %v784
          %802 = vmatpush.bf16.msra.mxu0 %v793
          %803 = vmatpush.bf16.msra.mxu0 %v792
          %804 = vmatpush.bf16.msra.mxu0 %v791
          %805 = vmatpush.bf16.msra.mxu0 %v790
          %806 = vmatpush.bf16.msra.mxu0 %v789
          %807 = vmatpush.bf16.msra.mxu0 %v788
          %808 = vmatpush.bf16.msra.mxu0 %v787
          %809 = vmatpush.bf16.msra.mxu0 %v786
          %810 = vmatmul.bf16.gmra.mxu0 %v733
          %v811 = vpop.f32.mrf.mxu0
          %v812 = vadd.f32 %v752, %v811
          %v813 = vpop.f32.mrf.mxu0
          %814 = vdwg.mxu0
          %v815 = vpack.c.bf16 %v812, %v812
          %v816 = vld [vmem:[#allocation9] sm:$0xf]
          %v817 = vld [vmem:[#allocation9 + $0x4] sm:$0xf]
          %v818 = vld [vmem:[#allocation9 + $0x8] sm:$0xf]
          %v819 = vld [vmem:[#allocation9 + $0xc] sm:$0xf]
          %v820 = vld [vmem:[#allocation9 + $0x10] sm:$0xf]
          %v821 = vld [vmem:[#allocation9 + $0x14] sm:$0xf]
          %v822 = vld [vmem:[#allocation9 + $0x18] sm:$0xf]
          %v823 = vld [vmem:[#allocation9 + $0x1c] sm:$0xf]
          %v824 = vld [vmem:[#allocation9 + $0x20] sm:$0xf]
          %v825 = vld [vmem:[#allocation9 + $0x24] sm:$0xf]
          %v826 = vld [vmem:[#allocation9 + $0x28] sm:$0xf]
          %v827 = vld [vmem:[#allocation9 + $0x2c] sm:$0xf]
          %v828 = vld [vmem:[#allocation9 + $0x30] sm:$0xf]
          %v829 = vld [vmem:[#allocation9 + $0x34] sm:$0xf]
          %v830 = vld [vmem:[#allocation9 + $0x38] sm:$0xf]
          %v831 = vld [vmem:[#allocation9 + $0x3c] sm:$0xf]
          %v832 = vld [vmem:[%s7] sm:$0x1]
          %v834 = vperm.slane %v832, 0
          %v852 = vunpack.c.l.b16 %v816
          %v853 = vunpack.c.l.b16 %v817
          %v854 = vunpack.c.l.b16 %v818
          %v855 = vunpack.c.l.b16 %v819
          %v856 = vunpack.c.l.b16 %v820
          %v857 = vunpack.c.l.b16 %v821
          %v858 = vunpack.c.l.b16 %v822
          %v859 = vunpack.c.l.b16 %v823
          %v860 = vunpack.c.l.b16 %v824
          %v861 = vunpack.c.l.b16 %v825
          %v862 = vunpack.c.l.b16 %v826
          %v863 = vunpack.c.l.b16 %v827
          %v864 = vunpack.c.l.b16 %v828
          %v865 = vunpack.c.l.b16 %v829
          %v866 = vunpack.c.l.b16 %v830
          %v867 = vunpack.c.l.b16 %v831
          %v868 = vpack.c.b16 %v853, %v852
          %v869 = vpack.c.b16 %v855, %v854
          %v870 = vpack.c.b16 %v857, %v856
          %v871 = vpack.c.b16 %v859, %v858
          %v872 = vpack.c.b16 %v861, %v860
          %v873 = vpack.c.b16 %v863, %v862
          %v874 = vpack.c.b16 %v865, %v864
          %v875 = vpack.c.b16 %v867, %v866
          %884 = vmatpush.bf16.msra.mxu0 %v875
          %885 = vmatpush.bf16.msra.mxu0 %v874
          %886 = vmatpush.bf16.msra.mxu0 %v873
          %887 = vmatpush.bf16.msra.mxu0 %v872
          %888 = vmatpush.bf16.msra.mxu0 %v871
          %889 = vmatpush.bf16.msra.mxu0 %v870
          %890 = vmatpush.bf16.msra.mxu0 %v869
          %891 = vmatpush.bf16.msra.mxu0 %v868
          %892 = vmatmul.bf16.gmra.mxu0 %v815
          %v893 = vpop.f32.mrf.mxu0
          %v894 = vadd.f32 %v834, %v893
          %v895 = vpop.f32.mrf.mxu0
          %896 = vdwg.mxu0
          %v897 = vmul.f32 %v894, 0.5
          %v898 = vmul.f32 %v894, 0.70710677
          %v899 = vmul.f32 %v898, %v898
          %v900 = vmin.f32 16.0, %v899
          %v901 = vmul.f32 %v900, 2.1237322e-06
          %v902 = vadd.f32 %v901, 0.00028619796
          %v903 = vmul.f32 %v900, %v902
          %v904 = vadd.f32 %v903, 0.0036580483
          %v905 = vmul.f32 %v900, %v904
          %v906 = vadd.f32 %v905, 0.05243302
          %v907 = vmul.f32 %v900, %v906
          %v908 = vadd.f32 %v907, 0.18741608
          %v909 = vmul.f32 %v900, %v908
          %v910 = vadd.f32 %v909, 1.1283791
          %v911 = vmul.f32 %v898, %v910
          %v912 = vmul.f32 %v900, 3.8918573e-05
          %v913 = vadd.f32 %v912, 0.001143296
          %v914 = vmul.f32 %v900, %v913
          %v915 = vadd.f32 %v914, 0.014752088
          %v916 = vmul.f32 %v900, %v915
          %v917 = vadd.f32 %v916, 0.112945676
          %v918 = vmul.f32 %v900, %v917
          %v919 = vadd.f32 %v918, 0.4994258
          %v920 = vmul.f32 %v900, %v919
          %v921 = vadd.f32 %v920, 1.0
          %v922 = vrcp.pop %v921
          %v923 = vmul.f32 %v921, %v922
          %v924 = vsub.f32 1.0, %v923
          %v925 = vmul.f32 %v922, %v924
          %v926 = vadd.f32 %v922, %v925
          %vm927 = vweird.f32 %v921
          %vm928 = vweird.f32 %v922
          %vm929 = vmor %vm927, %vm928
          %v930 = vsel %vm929, %v922, %v926
          %v931 = vand.u32 2147483647, %v921
          %vm932 = vcmp.eq.f32.partialorder %v931, 8.507059e+37
          %v933 = vand.u32 %v921, 2147483648
          %v934 = vor.u32 1.1754944e-38, %v933
          %v935 = vsel %vm932, %v934, %v930
          %v936 = vmul.f32 %v911, %v935
          %v937 = vmin.f32 %v936, 1.0
          %v938 = vmax.f32 %v937, -1.0
          %v939 = vadd.f32 %v938, 1.0
          %v940 = vmul.f32 %v897, %v939
          %v941 = vpack.c.bf16 %v940, %v940
          %v942 = vld [vmem:[#allocation11] sm:$0xf]
          %v943 = vld [vmem:[#allocation11 + $0x4] sm:$0xf]
          %v944 = vld [vmem:[#allocation11 + $0x8] sm:$0xf]
          %v945 = vld [vmem:[#allocation11 + $0xc] sm:$0xf]
          %v946 = vld [vmem:[#allocation11 + $0x10] sm:$0xf]
          %v947 = vld [vmem:[#allocation11 + $0x14] sm:$0xf]
          %v948 = vld [vmem:[#allocation11 + $0x18] sm:$0xf]
          %v949 = vld [vmem:[#allocation11 + $0x1c] sm:$0xf]
          %v950 = vld [vmem:[#allocation11 + $0x20] sm:$0xf]
          %v951 = vld [vmem:[#allocation11 + $0x24] sm:$0xf]
          %v952 = vld [vmem:[#allocation11 + $0x28] sm:$0xf]
          %v953 = vld [vmem:[#allocation11 + $0x2c] sm:$0xf]
          %v954 = vld [vmem:[#allocation11 + $0x30] sm:$0xf]
          %v955 = vld [vmem:[#allocation11 + $0x34] sm:$0xf]
          %v956 = vld [vmem:[#allocation11 + $0x38] sm:$0xf]
          %v957 = vld [vmem:[#allocation11 + $0x3c] sm:$0xf]
          %v958 = vld [vmem:[%s9] sm:$0x1]
          %v960 = vperm.slane %v958, 0
          %v978 = vunpack.c.l.b16 %v942
          %v979 = vunpack.c.l.b16 %v943
          %v980 = vunpack.c.l.b16 %v944
          %v981 = vunpack.c.l.b16 %v945
          %v982 = vunpack.c.l.b16 %v946
          %v983 = vunpack.c.l.b16 %v947
          %v984 = vunpack.c.l.b16 %v948
          %v985 = vunpack.c.l.b16 %v949
          %v986 = vunpack.c.l.b16 %v950
          %v987 = vunpack.c.l.b16 %v951
          %v988 = vunpack.c.l.b16 %v952
          %v989 = vunpack.c.l.b16 %v953
          %v990 = vunpack.c.l.b16 %v954
          %v991 = vunpack.c.l.b16 %v955
          %v992 = vunpack.c.l.b16 %v956
          %v993 = vunpack.c.l.b16 %v957
          %v994 = vpack.c.b16 %v979, %v978
          %v995 = vpack.c.b16 %v981, %v980
          %v996 = vpack.c.b16 %v983, %v982
          %v997 = vpack.c.b16 %v985, %v984
          %v998 = vpack.c.b16 %v987, %v986
          %v999 = vpack.c.b16 %v989, %v988
          %v1000 = vpack.c.b16 %v991, %v990
          %v1001 = vpack.c.b16 %v993, %v992
          %1010 = vmatpush.bf16.msra.mxu0 %v1001
          %1011 = vmatpush.bf16.msra.mxu0 %v1000
          %1012 = vmatpush.bf16.msra.mxu0 %v999
          %1013 = vmatpush.bf16.msra.mxu0 %v998
          %1014 = vmatpush.bf16.msra.mxu0 %v997
          %1015 = vmatpush.bf16.msra.mxu0 %v996
          %1016 = vmatpush.bf16.msra.mxu0 %v995
          %1017 = vmatpush.bf16.msra.mxu0 %v994
          %1018 = vmatmul.bf16.gmra.mxu0 %v941
          %v1019 = vpop.f32.mrf.mxu0
          %v1020 = vadd.f32 %v960, %v1019
          %v1021 = vpop.f32.mrf.mxu0
          %1022 = vdwg.mxu0
          %1023 = vmax.xlane.f32.xlu0 %v1020
          %v1024 = vpop.xlane.xlu0 %1023
          %v1025 = vsub.f32 %v1020, %v1024
          %v1026 = vmul.f32 %v1025, 1.442695
          %v1027 = vpow.pop %v1026
          %1028 = vadd.xlane.f32.xlu0 %v1027
          %v1029 = vpop.xlane.xlu0 %1028
          %v1030 = vrcp.pop %v1029
          %v1031 = vmul.f32 %v1029, %v1030
          %v1032 = vsub.f32 1.0, %v1031
          %v1033 = vmul.f32 %v1030, %v1032
          %v1034 = vadd.f32 %v1030, %v1033
          %vm1035 = vweird.f32 %v1029
          %vm1036 = vweird.f32 %v1030
          %vm1037 = vmor %vm1035, %vm1036
          %v1038 = vsel %vm1037, %v1030, %v1034
          %v1039 = vand.u32 2147483647, %v1029
          %vm1040 = vcmp.eq.f32.partialorder %v1039, 8.507059e+37
          %v1041 = vand.u32 %v1029, 2147483648
          %v1042 = vor.u32 1.1754944e-38, %v1041
          %v1043 = vsel %vm1040, %v1042, %v1038
          %v1044 = vmul.f32 %v1027, %v1043
          %v1045 = vlog2.pop %v1029
          %v1046 = vmul.f32 %v1045, 0.6931472
          %v1047 = vsub.f32 %v1025, %v1046
          %v1048 = vld [vmem:[%s513] sm:$0xff]
          %1049 = vset.pattern.permute.xlu0 0
          %1050 = vperm.xlu0 %1049, %v1048
          %v1051 = vpop.permute.xlu0 %1050
          %vm1052 = vcmp.eq.s32.totalorder %v1051, %v543
          %v1053 = vsel %vm1052, 1, 0
          %v1054 = vcvt.s32.f32 %v1053
          %v1055 = vmul.f32 %v1047, %v1054
          %1056 = vadd.xlane.f32.xlu0 %v1055
          %v1057 = vpop.xlane.xlu0 %1056
          %v1058 = vsub.f32 0.0, %v1057
          %vm1059 = vcmp.eq.s32.totalorder %v543, 127
          %v1060 = vsel %vm1059, %v1058, %v1044
          %1061 = vst [vmem:[%s505] sm:$0xff] %v812
          %1062 = vst [vmem:[%s505 + $0x8] sm:$0xff] %v1060
        $region88: #{tpu_custom_call.1} parent=59 // pred_fallthru
          _
        %s1063 = sand.u32 %s281, 1
        %s1064 = scalar_lea.sflag [#allocation5], %s1063
        %s1065 = sand.u32 %s281, 1
        %s1066 = smul.addr %s1065, 16
        %s1067 = scalar_lea.vmem [#allocation12], %s1066
        // Predicated region
        $region89: #{tpu_custom_call.1} parent=59 // pred_check
          %p1068 = pneg %p291
        $region90: #{tpu_custom_call.1} parent=59 // pred_check_branch
          %1070 = sbr.rel (%p1068) target = $region92
        $region91: #{tpu_custom_call.1} parent=59 // pred_region
          %1072 = vsyncadd %s1064, 0
          %s1073 = smul.addr %s35, 2
          %s1074 = smul.addr %s1073, 8
          %s1075 = scalar_lea.hbm %s10, %s1074
          %s1077 = sshll.u32 %s1067, 4
          %s1078 = int_to_ptr.vmem [resolvable:$true] %s1077
          %s1079 = sshll.u32 %s1075, 4
          %s1080 = int_to_ptr.hbm [resolvable:$true] %s1079
          %1082 = dma.vmem_to_hbm [thread:$0]  %s1078, 256, %s1080, %s1064
        $region92: #{tpu_custom_call.1} parent=59 // pred_fallthru
          _
      $region60: #{tpu_custom_call.1} parent=5 // pred_fallthru
        _
      %p1083 = scmp.le.s32.totalorder 2, %s26
      // Predicated region
      $region93: #{tpu_custom_call.1} parent=5 // pred_check
        %p1084 = pneg %p1083
      $region94: #{tpu_custom_call.1} parent=5 // pred_check_branch
        %1086 = sbr.rel (%p1084) target = $region96
      $region95: #{tpu_custom_call.1} parent=5 // pred_region
        %s1087 = ssub.s32 %s26, 2
        // Predicated region
        $region97: #{tpu_custom_call.1} parent=95 // pred_check
          %p1088 = pneg %p297
        $region98: #{tpu_custom_call.1} parent=95 // pred_check_branch
          %1090 = sbr.rel (%p1088) target = $region100
        $region99: #{tpu_custom_call.1} parent=95 // pred_region
          %s1091 = sand.u32 %s282, 1
          %s1092 = scalar_lea.sflag [#allocation5], %s1091
          %s1093 = sand.u32 %s282, 1
          %s1094 = smul.addr %s1093, 16
          %s1095 = scalar_lea.vmem [#allocation12], %s1094
          %1097 = dma.done %s1092, 256
        $region100: #{tpu_custom_call.1} parent=95 // pred_fallthru
          _
      $region96: #{tpu_custom_call.1} parent=5 // pred_fallthru
        _
    $region6: #{tpu_custom_call.1} parent=1 // loop_footer
      %s30 = sadd.s32 1, %s26
    $region7: #{tpu_custom_call.1} parent=1 // loop_footer_branch
      %25 = sbr.rel target = $region3
    $region8: #{tpu_custom_call.1} parent=1 // loop_exit
      _
    %1098 = vsyncpa [#allocation4], 1
    %s1099 = scalar_lea.sflag [#allocation4], 1
    %1100 = vsyncpa %s1099, 1
    %1101 = vsyncpa [#allocation7], 1
    %s1102 = scalar_lea.sflag [#allocation7], 1
    %1103 = vsyncpa %s1102, 1
    %1104 = vsyncpa [#allocation10], 1
    %1105 = vsyncpa [#allocation5], 1
    %s1106 = scalar_lea.sflag [#allocation5], 1
    %1107 = vsyncpa %s1106, 1

</llo_original>
